<compile_context>
chip_gen: v7x
topology: tpu7x:2x2x1
jax: 0.10.0
libtpu: 0.0.40
codegen_flags: <defaults>
</compile_context>

<pallas_src>
import functools
import math

import jax
import jax.numpy as jnp
from jax.experimental import pallas as pl
from jax.experimental.pallas import tpu as pltpu

LANE = 128
_BN_EPS = 1e-5
_L2_EPS = 1e-12
_VMEM_LIMIT = 64 * 1024 * 1024


# ---------------------------------------------------------------- helpers ----
def _round_up(x, m):
    return (x + m - 1) // m * m


def _pad2(a, rows, cols):
    r, c = a.shape
    return jnp.pad(a, ((0, rows - r), (0, cols - c)))


def _whole(shape):
    nd = len(shape)
    return pl.BlockSpec(shape, lambda *_: (0,) * nd)


# ----------------------- fused attention path (gram + MLPEmbed + softmax) ----
def _attention_path_kernel(*refs, s_len, t_len, inv_soft, l2_eps):
    # refs = [x_i, w1_i, b1_i, w2_i, b2_i] for each student layer, then each
    # teacher layer, then the output ref.
    o_ref = refs[-1]

    def embed(base):
        x_ref, w1_ref, b1_ref, w2_ref, b2_ref = refs[base:base + 5]
        x = x_ref[...]
        # Gram matrix sim = X @ X.T (f32 on the MXU).
        sim = jax.lax.dot_general(x, x, (((1,), (1,)), ((), ())),
                                  preferred_element_type=jnp.float32)
        h = jnp.dot(sim, w1_ref[...], preferred_element_type=jnp.float32) + b1_ref[...]
        h = jnp.maximum(h, 0.0)
        y = jnp.dot(h, w2_ref[...], preferred_element_type=jnp.float32) + b2_ref[...]
        # L2 normalize (rsqrt on EUP); padded columns are zero and stay inert.
        inv_norm = jax.lax.rsqrt(jnp.sum(y * y, axis=1, keepdims=True) + l2_eps)
        return y * inv_norm

    q = [embed(5 * i) for i in range(s_len)]
    k = [embed(5 * (s_len + j)) for j in range(t_len)]
    bsz = q[0].shape[0]

    col = jax.lax.broadcasted_iota(jnp.int32, (bsz, t_len), 1)
    for i in range(s_len):
        # energy row e[:, j] = <q_i, k_j> per batch element (one-hot select, no concat).
        e = jnp.zeros((bsz, t_len), jnp.float32)
        for j in range(t_len):
            e_ij = jnp.sum(q[i] * k[j], axis=1, keepdims=True)
            e = jnp.where(col == j, e_ij, e)
        e = e * inv_soft
        e = e - jnp.max(e, axis=-1, keepdims=True)
        p = jnp.exp(e)
        o_ref[i, :, :] = p * pl.reciprocal(jnp.sum(p, axis=-1, keepdims=True), approx=True)


def attention_path(query_params, key_params, feat_s, feat_t, soft):
    s_len, t_len = len(feat_s), len(feat_t)
    bsz = feat_s[0].shape[0]
    xs = [f.reshape(bsz, -1) for f in feat_s] + [f.reshape(bsz, -1) for f in feat_t]
    ps = list(query_params) + list(key_params)

    args, in_specs = [], []
    for x, p in zip(xs, ps):
        for a in (x, p["w1"], p["b1"], p["w2"], p["b2"]):
            args.append(a)
            in_specs.append(_whole(a.shape))

    att = pl.pallas_call(
        functools.partial(_attention_path_kernel, s_len=s_len, t_len=t_len,
                          inv_soft=1.0 / float(soft), l2_eps=_L2_EPS),
        out_shape=jax.ShapeDtypeStruct((s_len, bsz, t_len), jnp.float32),
        in_specs=in_specs,
        out_specs=_whole((s_len, bsz, t_len)),
    )(*args)
    return jnp.transpose(att, (1, 0, 2))          # (bsz, s_len, t_len)


# ------------------------------------------ fused Proj regressor (one call) --
def _proj_fused_kernel(x_ref, w1_ref, g1_ref, b1_ref, w2_ref, g2_ref, b2_ref, w3_ref,
                       o_ref, a_scr, *, m, hdim, wdim, pad0, eps):
    cmid = w1_ref.shape[1]          # lane-padded mid-channel width (128)
    inv_m = 1.0 / m

    # --- stage 1: 1x1 conv (MXU) + BN1 (training-mode batch stats) + ReLU -----
    y1 = jnp.dot(x_ref[...], w1_ref[...], preferred_element_type=jnp.float32)
    mean1 = jnp.sum(y1, axis=0, keepdims=True) * inv_m
    d1 = y1 - mean1
    var1 = jnp.sum(d1 * d1, axis=0, keepdims=True) * inv_m
    a = jnp.maximum(d1 * (g1_ref[...] * jax.lax.rsqrt(var1 + eps)) + b1_ref[...], 0.0)

    # --- stage 2: 3x3 conv (padding=1) as 9 accumulated taps ------------------
    # Stage the activation in a row-padded VMEM scratch so every tap is a shifted
    # contiguous row window (no HBM im2col); boundary masks zero invalid rows.
    a_scr[0:pad0, :] = jnp.zeros((pad0, cmid), jnp.float32)
    a_scr[pl.ds(pad0 + m, pad0), :] = jnp.zeros((pad0, cmid), jnp.float32)
    a_scr[pl.ds(pad0, m), :] = a

    rows = jax.lax.broadcasted_iota(jnp.int32, (m, 1), 0)
    hh = (rows // wdim) % hdim
    ww = rows % wdim
    # Hoisted edge masks; each tap combines at most two with a single AND.
    hmask = {-1: hh > 0, 0: None, 1: hh < hdim - 1}
    wmask = {-1: ww > 0, 0: None, 1: ww < wdim - 1}

    acc = None
    for t in range(9):
        dh, dw = t // 3 - 1, t % 3 - 1
        a_s = a_scr[pl.ds(pad0 + dh * wdim + dw, m), :]
        valid = hmask[dh]
        if wmask[dw] is not None:
            valid = wmask[dw] if valid is None else (valid & wmask[dw])
        if valid is not None:                      # center tap skips the select
            a_s = jnp.where(valid, a_s, 0.0)
        tap = jnp.dot(a_s.astype(jnp.bfloat16),
                      w2_ref[pl.ds(t * cmid, cmid), :],
                      preferred_element_type=jnp.float32)
        acc = tap if acc is None else acc + tap    # accumulate as a VMEM value

    # --- stage 3: BN2 + ReLU + final 1x1 conv ---------------------------------
    mean2 = jnp.sum(acc, axis=0, keepdims=True) * inv_m
    d2 = acc - mean2
    var2 = jnp.sum(d2 * d2, axis=0, keepdims=True) * inv_m
    a2 = jnp.maximum(d2 * (g2_ref[...] * jax.lax.rsqrt(var2 + eps)) + b2_ref[...], 0.0)
    o_ref[...] = jnp.dot(a2.astype(jnp.bfloat16), w3_ref[...],
                         preferred_element_type=jnp.float32)


def proj_forward(p, x_nchw):
    n, c, h, w = x_nchw.shape
    m = n * h * w
    cmid_p, cout_p, cout = p["cmid_p"], p["cout_p"], p["cout"]

    rows = jnp.transpose(x_nchw, (0, 2, 3, 1)).reshape(m, c).astype(jnp.bfloat16)
    pad0 = _round_up(w + 1, 8)

    y = pl.pallas_call(
        functools.partial(_proj_fused_kernel, m=m, hdim=h, wdim=w, pad0=pad0,
                          eps=_BN_EPS),
        out_shape=jax.ShapeDtypeStruct((m, cout_p), jnp.float32),
        in_specs=[_whole((m, c)), _whole((c, cmid_p)),
                  _whole((1, cmid_p)), _whole((1, cmid_p)),
                  _whole((9 * cmid_p, cmid_p)),
                  _whole((1, cmid_p)), _whole((1, cmid_p)),
                  _whole((cmid_p, cout_p))],
        out_specs=_whole((m, cout_p)),
        scratch_shapes=[pltpu.VMEM((m + 2 * pad0, cmid_p), jnp.float32)],
        compiler_params=pltpu.CompilerParams(vmem_limit_bytes=_VMEM_LIMIT),
    )(rows, p["w1"], p["g1"], p["be1"], p["w2"], p["g2"], p["be2"], p["w3"])

    y = y[:, :cout].reshape(n, h, w, cout)
    return jnp.transpose(y, (0, 3, 1, 2))


# ----------------------------------------------------- adaptive avg pooling --
def adaptive_avg_pool2d(x_nchw, out_hw):
    # TODO(synk): only the evenly-divisible case of F.adaptive_avg_pool2d is implemented.
    n, c, h, w = x_nchw.shape
    oh, ow = out_hw
    assert h % oh == 0 and w % ow == 0
    x = x_nchw.reshape(n, c, oh, h // oh, ow, w // ow)
    return x.mean(axis=(3, 5))


# ------------------------------------------------------------- parameters ----
def _init_linear(key, din, dout):
    kw, kb = jax.random.split(key)
    bound = 1.0 / math.sqrt(din)
    w = jax.random.uniform(kw, (din, dout), jnp.float32, -bound, bound)
    b = jax.random.uniform(kb, (1, dout), jnp.float32, -bound, bound)
    return w, b


def init_mlp_embed(key, dim_in, dim_out):
    k1, k2 = jax.random.split(key)
    dhid = 2 * dim_out
    w1, b1 = _init_linear(k1, dim_in, dhid)
    w2, b2 = _init_linear(k2, dhid, dim_out)
    dhp, dop = _round_up(dhid, LANE), _round_up(dim_out, LANE)
    # Hidden/output dims zero-padded to lane-dense 128 (padding numerically inert);
    # the contraction dim keeps its real size and is used whole in-kernel.
    return {"w1": _pad2(w1, dim_in, dhp), "b1": _pad2(b1, 1, dhp),
            "w2": _pad2(w2, dhp, dop), "b2": _pad2(b2, 1, dop)}


def init_proj(key, cin, cout):
    cmid = 2 * cout
    cmid_p, cout_p = _round_up(cmid, LANE), _round_up(cout, LANE)
    k1, k2, k3 = jax.random.split(key, 3)
    w1 = jax.random.normal(k1, (cin, cmid), jnp.float32) / math.sqrt(cin)
    w2 = jax.random.normal(k2, (3, 3, cmid, cmid), jnp.float32) / math.sqrt(9 * cmid)
    w3 = jax.random.normal(k3, (cmid, cout), jnp.float32) / math.sqrt(cmid)
    w2p = jnp.pad(w2, ((0, 0), (0, 0), (0, cmid_p - cmid), (0, cmid_p - cmid)))
    ones_pad = jnp.pad(jnp.ones((1, cmid), jnp.float32), ((0, 0), (0, cmid_p - cmid)))
    return {"w1": _pad2(w1, cin, cmid_p).astype(jnp.bfloat16),
            "g1": ones_pad, "be1": jnp.zeros((1, cmid_p), jnp.float32),
            "w2": w2p.reshape(9 * cmid_p, cmid_p).astype(jnp.bfloat16),
            "g2": ones_pad, "be2": jnp.zeros((1, cmid_p), jnp.float32),
            "w3": _pad2(w3, cmid_p, cout_p).astype(jnp.bfloat16),
            "cmid_p": cmid_p, "cout_p": cout_p, "cout": cout}


def init_selfa(key, feat_dim, s_n, t_n, factor=4):
    d = feat_dim // factor
    keys = jax.random.split(key, len(s_n) + len(t_n) + len(s_n) * len(t_n))
    it = iter(keys)
    query = [init_mlp_embed(next(it), feat_dim, d) for _ in s_n]
    keyp = [init_mlp_embed(next(it), feat_dim, d) for _ in t_n]
    regressor = [[init_proj(next(it), s_n[i], t_n[j]) for j in range(len(t_n))]
                 for i in range(len(s_n))]
    return {"query": query, "key": keyp, "regressor": regressor}


# ------------------------------------------------------------ SelfA forward --
def selfa_forward(params, feat_s, feat_t, soft):
    s_len, t_len = len(feat_s), len(feat_t)
    # One fused kernel for gram matrices + query/key MLPEmbeds + bmm + softmax.
    attention = attention_path(params["query"], params["key"], feat_s, feat_t, soft)

    # TODO(synk): BatchNorm uses training-mode batch statistics (no running stats / eval mode).
    proj_value_stu, value_tea = [], []
    for i in range(s_len):
        proj_value_stu.append([])
        value_tea.append([])
        for j in range(t_len):
            s_h, t_h = feat_s[i].shape[2], feat_t[j].shape[2]
            if s_h > t_h:
                source, target = adaptive_avg_pool2d(feat_s[i], (t_h, t_h)), feat_t[j]
            else:
                source, target = feat_s[i], adaptive_avg_pool2d(feat_t[j], (s_h, s_h))
            proj_value_stu[i].append(proj_forward(params["regressor"][i][j], source))
            value_tea[i].append(target)
    return proj_value_stu, value_tea, attention


# ----------------------------------------------------------------- driver ----
if __name__ == "__main__":
    feat_dim = 32            # in SelfA, batch size == feat_dim
    factor = 4
    soft = 4.0
    s_n = [8, 16]            # student channel counts
    t_n = [8, 4]             # teacher channel counts
    s_hw = [8, 4]            # student spatial sizes
    t_hw = [4, 8]            # teacher spatial sizes

    key = jax.random.PRNGKey(0)
    kp, kx = jax.random.split(key)
    params = init_selfa(kp, feat_dim, s_n, t_n, factor)

    xkeys = jax.random.split(kx, len(s_n) + len(t_n))
    feat_s = [jax.random.normal(xkeys[i], (feat_dim, s_n[i], s_hw[i], s_hw[i]), jnp.float32)
              for i in range(len(s_n))]
    feat_t = [jax.random.normal(xkeys[len(s_n) + j], (feat_dim, t_n[j], t_hw[j], t_hw[j]), jnp.float32)
              for j in range(len(t_n))]

    proj_value_stu, value_tea, attention = selfa_forward(params, feat_s, feat_t, soft)
    jax.block_until_ready((proj_value_stu, value_tea, attention))
    print("KERNEL_OK")
</pallas_src>

<mosaic_0001>
module attributes {stable_mosaic.version = 11 : i64} {
  func.func @_attention_path_kernel(%arg0: memref<32x512xf32, #tpu.memory_space<vmem>>, %arg1: memref<32x128xf32, #tpu.memory_space<vmem>>, %arg2: memref<1x128xf32, #tpu.memory_space<vmem>>, %arg3: memref<128x128xf32, #tpu.memory_space<vmem>>, %arg4: memref<1x128xf32, #tpu.memory_space<vmem>>, %arg5: memref<32x256xf32, #tpu.memory_space<vmem>>, %arg6: memref<32x128xf32, #tpu.memory_space<vmem>>, %arg7: memref<1x128xf32, #tpu.memory_space<vmem>>, %arg8: memref<128x128xf32, #tpu.memory_space<vmem>>, %arg9: memref<1x128xf32, #tpu.memory_space<vmem>>, %arg10: memref<32x128xf32, #tpu.memory_space<vmem>>, %arg11: memref<32x128xf32, #tpu.memory_space<vmem>>, %arg12: memref<1x128xf32, #tpu.memory_space<vmem>>, %arg13: memref<128x128xf32, #tpu.memory_space<vmem>>, %arg14: memref<1x128xf32, #tpu.memory_space<vmem>>, %arg15: memref<32x256xf32, #tpu.memory_space<vmem>>, %arg16: memref<32x128xf32, #tpu.memory_space<vmem>>, %arg17: memref<1x128xf32, #tpu.memory_space<vmem>>, %arg18: memref<128x128xf32, #tpu.memory_space<vmem>>, %arg19: memref<1x128xf32, #tpu.memory_space<vmem>>, %arg20: memref<2x32x2xf32, #tpu.memory_space<vmem>>) attributes {dimension_semantics = [], scalar_prefetch = 0 : i64, scratch_operands = 0 : i64, tpu.core_type = #tpu.core_type<tc>} {
    %c0 = arith.constant 0 : index
    %c0_0 = arith.constant 0 : index
    %0 = vector.load %arg0[%c0, %c0_0] : memref<32x512xf32, #tpu.memory_space<vmem>>, vector<32x512xf32>
    %cst = arith.constant dense<0.000000e+00> : vector<32x32xf32>
    %1 = tpu.matmul %0, %0, %cst {dimension_numbers = #tpu.dot_dimension_numbers<[1], [1], [0], [0], [0, 0, 1, 0], [], []>} : vector<32x512xf32>, vector<32x512xf32>, vector<32x32xf32> -> vector<32x32xf32>
    %c0_1 = arith.constant 0 : index
    %c0_2 = arith.constant 0 : index
    %2 = vector.load %arg1[%c0_1, %c0_2] : memref<32x128xf32, #tpu.memory_space<vmem>>, vector<32x128xf32>
    %cst_3 = arith.constant dense<0.000000e+00> : vector<32x128xf32>
    %3 = tpu.matmul %1, %2, %cst_3 {dimension_numbers = #tpu.dot_dimension_numbers<[1], [0], [0], [1], [0, 0, 1, 1], [], []>} : vector<32x32xf32>, vector<32x128xf32>, vector<32x128xf32> -> vector<32x128xf32>
    %c0_4 = arith.constant 0 : index
    %c0_5 = arith.constant 0 : index
    %4 = vector.load %arg2[%c0_4, %c0_5] : memref<1x128xf32, #tpu.memory_space<vmem>>, vector<1x128xf32>
    %5 = vector.broadcast %4 : vector<1x128xf32> to vector<32x128xf32>
    %6 = arith.addf %3, %5 : vector<32x128xf32>
    %cst_6 = arith.constant 0.000000e+00 : f32
    %7 = vector.broadcast %cst_6 : f32 to vector<32x128xf32>
    %8 = arith.maximumf %6, %7 : vector<32x128xf32>
    %c0_7 = arith.constant 0 : index
    %c0_8 = arith.constant 0 : index
    %9 = vector.load %arg3[%c0_7, %c0_8] : memref<128x128xf32, #tpu.memory_space<vmem>>, vector<128x128xf32>
    %cst_9 = arith.constant dense<0.000000e+00> : vector<32x128xf32>
    %10 = tpu.matmul %8, %9, %cst_9 {dimension_numbers = #tpu.dot_dimension_numbers<[1], [0], [0], [1], [0, 0, 1, 1], [], []>} : vector<32x128xf32>, vector<128x128xf32>, vector<32x128xf32> -> vector<32x128xf32>
    %c0_10 = arith.constant 0 : index
    %c0_11 = arith.constant 0 : index
    %11 = vector.load %arg4[%c0_10, %c0_11] : memref<1x128xf32, #tpu.memory_space<vmem>>, vector<1x128xf32>
    %12 = vector.broadcast %11 : vector<1x128xf32> to vector<32x128xf32>
    %13 = arith.addf %10, %12 : vector<32x128xf32>
    %14 = arith.mulf %13, %13 : vector<32x128xf32>
    %cst_12 = arith.constant dense<0.000000e+00> : vector<32xf32>
    %15 = vector.multi_reduction <add>, %14, %cst_12 [1] : vector<32x128xf32> to vector<32xf32>
    %16 = vector.shape_cast %15 : vector<32xf32> to vector<32x1xf32>
    %cst_13 = arith.constant 9.99999996E-13 : f32
    %17 = vector.broadcast %cst_13 : f32 to vector<32x1xf32>
    %18 = arith.addf %16, %17 : vector<32x1xf32>
    %19 = math.rsqrt %18 : vector<32x1xf32>
    %20 = vector.broadcast %19 : vector<32x1xf32> to vector<32x128xf32>
    %21 = arith.mulf %13, %20 : vector<32x128xf32>
    %c0_14 = arith.constant 0 : index
    %c0_15 = arith.constant 0 : index
    %22 = vector.load %arg5[%c0_14, %c0_15] : memref<32x256xf32, #tpu.memory_space<vmem>>, vector<32x256xf32>
    %cst_16 = arith.constant dense<0.000000e+00> : vector<32x32xf32>
    %23 = tpu.matmul %22, %22, %cst_16 {dimension_numbers = #tpu.dot_dimension_numbers<[1], [1], [0], [0], [0, 0, 1, 0], [], []>} : vector<32x256xf32>, vector<32x256xf32>, vector<32x32xf32> -> vector<32x32xf32>
    %c0_17 = arith.constant 0 : index
    %c0_18 = arith.constant 0 : index
    %24 = vector.load %arg6[%c0_17, %c0_18] : memref<32x128xf32, #tpu.memory_space<vmem>>, vector<32x128xf32>
    %cst_19 = arith.constant dense<0.000000e+00> : vector<32x128xf32>
    %25 = tpu.matmul %23, %24, %cst_19 {dimension_numbers = #tpu.dot_dimension_numbers<[1], [0], [0], [1], [0, 0, 1, 1], [], []>} : vector<32x32xf32>, vector<32x128xf32>, vector<32x128xf32> -> vector<32x128xf32>
    %c0_20 = arith.constant 0 : index
    %c0_21 = arith.constant 0 : index
    %26 = vector.load %arg7[%c0_20, %c0_21] : memref<1x128xf32, #tpu.memory_space<vmem>>, vector<1x128xf32>
    %27 = vector.broadcast %26 : vector<1x128xf32> to vector<32x128xf32>
    %28 = arith.addf %25, %27 : vector<32x128xf32>
    %cst_22 = arith.constant 0.000000e+00 : f32
    %29 = vector.broadcast %cst_22 : f32 to vector<32x128xf32>
    %30 = arith.maximumf %28, %29 : vector<32x128xf32>
    %c0_23 = arith.constant 0 : index
    %c0_24 = arith.constant 0 : index
    %31 = vector.load %arg8[%c0_23, %c0_24] : memref<128x128xf32, #tpu.memory_space<vmem>>, vector<128x128xf32>
    %cst_25 = arith.constant dense<0.000000e+00> : vector<32x128xf32>
    %32 = tpu.matmul %30, %31, %cst_25 {dimension_numbers = #tpu.dot_dimension_numbers<[1], [0], [0], [1], [0, 0, 1, 1], [], []>} : vector<32x128xf32>, vector<128x128xf32>, vector<32x128xf32> -> vector<32x128xf32>
    %c0_26 = arith.constant 0 : index
    %c0_27 = arith.constant 0 : index
    %33 = vector.load %arg9[%c0_26, %c0_27] : memref<1x128xf32, #tpu.memory_space<vmem>>, vector<1x128xf32>
    %34 = vector.broadcast %33 : vector<1x128xf32> to vector<32x128xf32>
    %35 = arith.addf %32, %34 : vector<32x128xf32>
    %36 = arith.mulf %35, %35 : vector<32x128xf32>
    %cst_28 = arith.constant dense<0.000000e+00> : vector<32xf32>
    %37 = vector.multi_reduction <add>, %36, %cst_28 [1] : vector<32x128xf32> to vector<32xf32>
    %38 = vector.shape_cast %37 : vector<32xf32> to vector<32x1xf32>
    %cst_29 = arith.constant 9.99999996E-13 : f32
    %39 = vector.broadcast %cst_29 : f32 to vector<32x1xf32>
    %40 = arith.addf %38, %39 : vector<32x1xf32>
    %41 = math.rsqrt %40 : vector<32x1xf32>
    %42 = vector.broadcast %41 : vector<32x1xf32> to vector<32x128xf32>
    %43 = arith.mulf %35, %42 : vector<32x128xf32>
    %c0_30 = arith.constant 0 : index
    %c0_31 = arith.constant 0 : index
    %44 = vector.load %arg10[%c0_30, %c0_31] : memref<32x128xf32, #tpu.memory_space<vmem>>, vector<32x128xf32>
    %cst_32 = arith.constant dense<0.000000e+00> : vector<32x32xf32>
    %45 = tpu.matmul %44, %44, %cst_32 {dimension_numbers = #tpu.dot_dimension_numbers<[1], [1], [0], [0], [0, 0, 1, 0], [], []>} : vector<32x128xf32>, vector<32x128xf32>, vector<32x32xf32> -> vector<32x32xf32>
    %c0_33 = arith.constant 0 : index
    %c0_34 = arith.constant 0 : index
    %46 = vector.load %arg11[%c0_33, %c0_34] : memref<32x128xf32, #tpu.memory_space<vmem>>, vector<32x128xf32>
    %cst_35 = arith.constant dense<0.000000e+00> : vector<32x128xf32>
    %47 = tpu.matmul %45, %46, %cst_35 {dimension_numbers = #tpu.dot_dimension_numbers<[1], [0], [0], [1], [0, 0, 1, 1], [], []>} : vector<32x32xf32>, vector<32x128xf32>, vector<32x128xf32> -> vector<32x128xf32>
    %c0_36 = arith.constant 0 : index
    %c0_37 = arith.constant 0 : index
    %48 = vector.load %arg12[%c0_36, %c0_37] : memref<1x128xf32, #tpu.memory_space<vmem>>, vector<1x128xf32>
    %49 = vector.broadcast %48 : vector<1x128xf32> to vector<32x128xf32>
    %50 = arith.addf %47, %49 : vector<32x128xf32>
    %cst_38 = arith.constant 0.000000e+00 : f32
    %51 = vector.broadcast %cst_38 : f32 to vector<32x128xf32>
    %52 = arith.maximumf %50, %51 : vector<32x128xf32>
    %c0_39 = arith.constant 0 : index
    %c0_40 = arith.constant 0 : index
    %53 = vector.load %arg13[%c0_39, %c0_40] : memref<128x128xf32, #tpu.memory_space<vmem>>, vector<128x128xf32>
    %cst_41 = arith.constant dense<0.000000e+00> : vector<32x128xf32>
    %54 = tpu.matmul %52, %53, %cst_41 {dimension_numbers = #tpu.dot_dimension_numbers<[1], [0], [0], [1], [0, 0, 1, 1], [], []>} : vector<32x128xf32>, vector<128x128xf32>, vector<32x128xf32> -> vector<32x128xf32>
    %c0_42 = arith.constant 0 : index
    %c0_43 = arith.constant 0 : index
    %55 = vector.load %arg14[%c0_42, %c0_43] : memref<1x128xf32, #tpu.memory_space<vmem>>, vector<1x128xf32>
    %56 = vector.broadcast %55 : vector<1x128xf32> to vector<32x128xf32>
    %57 = arith.addf %54, %56 : vector<32x128xf32>
    %58 = arith.mulf %57, %57 : vector<32x128xf32>
    %cst_44 = arith.constant dense<0.000000e+00> : vector<32xf32>
    %59 = vector.multi_reduction <add>, %58, %cst_44 [1] : vector<32x128xf32> to vector<32xf32>
    %60 = vector.shape_cast %59 : vector<32xf32> to vector<32x1xf32>
    %cst_45 = arith.constant 9.99999996E-13 : f32
    %61 = vector.broadcast %cst_45 : f32 to vector<32x1xf32>
    %62 = arith.addf %60, %61 : vector<32x1xf32>
    %63 = math.rsqrt %62 : vector<32x1xf32>
    %64 = vector.broadcast %63 : vector<32x1xf32> to vector<32x128xf32>
    %65 = arith.mulf %57, %64 : vector<32x128xf32>
    %c0_46 = arith.constant 0 : index
    %c0_47 = arith.constant 0 : index
    %66 = vector.load %arg15[%c0_46, %c0_47] : memref<32x256xf32, #tpu.memory_space<vmem>>, vector<32x256xf32>
    %cst_48 = arith.constant dense<0.000000e+00> : vector<32x32xf32>
    %67 = tpu.matmul %66, %66, %cst_48 {dimension_numbers = #tpu.dot_dimension_numbers<[1], [1], [0], [0], [0, 0, 1, 0], [], []>} : vector<32x256xf32>, vector<32x256xf32>, vector<32x32xf32> -> vector<32x32xf32>
    %c0_49 = arith.constant 0 : index
    %c0_50 = arith.constant 0 : index
    %68 = vector.load %arg16[%c0_49, %c0_50] : memref<32x128xf32, #tpu.memory_space<vmem>>, vector<32x128xf32>
    %cst_51 = arith.constant dense<0.000000e+00> : vector<32x128xf32>
    %69 = tpu.matmul %67, %68, %cst_51 {dimension_numbers = #tpu.dot_dimension_numbers<[1], [0], [0], [1], [0, 0, 1, 1], [], []>} : vector<32x32xf32>, vector<32x128xf32>, vector<32x128xf32> -> vector<32x128xf32>
    %c0_52 = arith.constant 0 : index
    %c0_53 = arith.constant 0 : index
    %70 = vector.load %arg17[%c0_52, %c0_53] : memref<1x128xf32, #tpu.memory_space<vmem>>, vector<1x128xf32>
    %71 = vector.broadcast %70 : vector<1x128xf32> to vector<32x128xf32>
    %72 = arith.addf %69, %71 : vector<32x128xf32>
    %cst_54 = arith.constant 0.000000e+00 : f32
    %73 = vector.broadcast %cst_54 : f32 to vector<32x128xf32>
    %74 = arith.maximumf %72, %73 : vector<32x128xf32>
    %c0_55 = arith.constant 0 : index
    %c0_56 = arith.constant 0 : index
    %75 = vector.load %arg18[%c0_55, %c0_56] : memref<128x128xf32, #tpu.memory_space<vmem>>, vector<128x128xf32>
    %cst_57 = arith.constant dense<0.000000e+00> : vector<32x128xf32>
    %76 = tpu.matmul %74, %75, %cst_57 {dimension_numbers = #tpu.dot_dimension_numbers<[1], [0], [0], [1], [0, 0, 1, 1], [], []>} : vector<32x128xf32>, vector<128x128xf32>, vector<32x128xf32> -> vector<32x128xf32>
    %c0_58 = arith.constant 0 : index
    %c0_59 = arith.constant 0 : index
    %77 = vector.load %arg19[%c0_58, %c0_59] : memref<1x128xf32, #tpu.memory_space<vmem>>, vector<1x128xf32>
    %78 = vector.broadcast %77 : vector<1x128xf32> to vector<32x128xf32>
    %79 = arith.addf %76, %78 : vector<32x128xf32>
    %80 = arith.mulf %79, %79 : vector<32x128xf32>
    %cst_60 = arith.constant dense<0.000000e+00> : vector<32xf32>
    %81 = vector.multi_reduction <add>, %80, %cst_60 [1] : vector<32x128xf32> to vector<32xf32>
    %82 = vector.shape_cast %81 : vector<32xf32> to vector<32x1xf32>
    %cst_61 = arith.constant 9.99999996E-13 : f32
    %83 = vector.broadcast %cst_61 : f32 to vector<32x1xf32>
    %84 = arith.addf %82, %83 : vector<32x1xf32>
    %85 = math.rsqrt %84 : vector<32x1xf32>
    %86 = vector.broadcast %85 : vector<32x1xf32> to vector<32x128xf32>
    %87 = arith.mulf %79, %86 : vector<32x128xf32>
    %88 = tpu.iota {dimensions = array<i32: 1>} : vector<32x2xi32>
    %cst_62 = arith.constant 0.000000e+00 : f32
    %89 = vector.broadcast %cst_62 : f32 to vector<32x2xf32>
    %90 = arith.mulf %21, %65 : vector<32x128xf32>
    %cst_63 = arith.constant dense<0.000000e+00> : vector<32xf32>
    %91 = vector.multi_reduction <add>, %90, %cst_63 [1] : vector<32x128xf32> to vector<32xf32>
    %92 = vector.shape_cast %91 : vector<32xf32> to vector<32x1xf32>
    %c0_i32 = arith.constant 0 : i32
    %93 = vector.broadcast %c0_i32 : i32 to vector<32x2xi32>
    %94 = arith.cmpi eq, %88, %93 : vector<32x2xi32>
    %95 = vector.shape_cast %92 : vector<32x1xf32> to vector<32x1xf32>
    %96 = vector.broadcast %95 : vector<32x1xf32> to vector<32x2xf32>
    %97 = arith.select %94, %96, %89 : vector<32x2xi1>, vector<32x2xf32>
    %98 = arith.mulf %21, %87 : vector<32x128xf32>
    %cst_64 = arith.constant dense<0.000000e+00> : vector<32xf32>
    %99 = vector.multi_reduction <add>, %98, %cst_64 [1] : vector<32x128xf32> to vector<32xf32>
    %100 = vector.shape_cast %99 : vector<32xf32> to vector<32x1xf32>
    %c1_i32 = arith.constant 1 : i32
    %101 = vector.broadcast %c1_i32 : i32 to vector<32x2xi32>
    %102 = arith.cmpi eq, %88, %101 : vector<32x2xi32>
    %103 = vector.shape_cast %100 : vector<32x1xf32> to vector<32x1xf32>
    %104 = vector.broadcast %103 : vector<32x1xf32> to vector<32x2xf32>
    %105 = arith.select %102, %104, %97 : vector<32x2xi1>, vector<32x2xf32>
    %cst_65 = arith.constant 2.500000e-01 : f32
    %106 = vector.broadcast %cst_65 : f32 to vector<32x2xf32>
    %107 = arith.mulf %105, %106 : vector<32x2xf32>
    %cst_66 = arith.constant dense<0xFF800000> : vector<32xf32>
    %108 = vector.multi_reduction <maximumf>, %107, %cst_66 [1] : vector<32x2xf32> to vector<32xf32>
    %109 = vector.shape_cast %108 : vector<32xf32> to vector<32x1xf32>
    %110 = vector.broadcast %109 : vector<32x1xf32> to vector<32x2xf32>
    %111 = arith.subf %107, %110 : vector<32x2xf32>
    %112 = math.exp %111 : vector<32x2xf32>
    %cst_67 = arith.constant dense<0.000000e+00> : vector<32xf32>
    %113 = vector.multi_reduction <add>, %112, %cst_67 [1] : vector<32x2xf32> to vector<32xf32>
    %114 = vector.shape_cast %113 : vector<32xf32> to vector<32x1xf32>
    %115 = tpu.reciprocal %114 {approx = true} : vector<32x1xf32> -> vector<32x1xf32>
    %116 = vector.broadcast %115 : vector<32x1xf32> to vector<32x2xf32>
    %117 = arith.mulf %112, %116 : vector<32x2xf32>
    %c0_68 = arith.constant 0 : index
    %c0_69 = arith.constant 0 : index
    %c0_70 = arith.constant 0 : index
    %118 = vector.load %arg20[%c0_68, %c0_69, %c0_70] : memref<2x32x2xf32, #tpu.memory_space<vmem>>, vector<1x32x2xf32>
    %119 = vector.shape_cast %118 : vector<1x32x2xf32> to vector<32x2xf32>
    %120 = vector.shape_cast %117 : vector<32x2xf32> to vector<1x32x2xf32>
    tpu.vector_store %arg20[%c0_68, %c0_69, %c0_70], %120 {strides = array<i32>} : memref<2x32x2xf32, #tpu.memory_space<vmem>>, vector<1x32x2xf32>,
    %cst_71 = arith.constant 0.000000e+00 : f32
    %121 = vector.broadcast %cst_71 : f32 to vector<32x2xf32>
    %122 = arith.mulf %43, %65 : vector<32x128xf32>
    %cst_72 = arith.constant dense<0.000000e+00> : vector<32xf32>
    %123 = vector.multi_reduction <add>, %122, %cst_72 [1] : vector<32x128xf32> to vector<32xf32>
    %124 = vector.shape_cast %123 : vector<32xf32> to vector<32x1xf32>
    %c0_i32_73 = arith.constant 0 : i32
    %125 = vector.broadcast %c0_i32_73 : i32 to vector<32x2xi32>
    %126 = arith.cmpi eq, %88, %125 : vector<32x2xi32>
    %127 = vector.shape_cast %124 : vector<32x1xf32> to vector<32x1xf32>
    %128 = vector.broadcast %127 : vector<32x1xf32> to vector<32x2xf32>
    %129 = arith.select %126, %128, %121 : vector<32x2xi1>, vector<32x2xf32>
    %130 = arith.mulf %43, %87 : vector<32x128xf32>
    %cst_74 = arith.constant dense<0.000000e+00> : vector<32xf32>
    %131 = vector.multi_reduction <add>, %130, %cst_74 [1] : vector<32x128xf32> to vector<32xf32>
    %132 = vector.shape_cast %131 : vector<32xf32> to vector<32x1xf32>
    %c1_i32_75 = arith.constant 1 : i32
    %133 = vector.broadcast %c1_i32_75 : i32 to vector<32x2xi32>
    %134 = arith.cmpi eq, %88, %133 : vector<32x2xi32>
    %135 = vector.shape_cast %132 : vector<32x1xf32> to vector<32x1xf32>
    %136 = vector.broadcast %135 : vector<32x1xf32> to vector<32x2xf32>
    %137 = arith.select %134, %136, %129 : vector<32x2xi1>, vector<32x2xf32>
    %cst_76 = arith.constant 2.500000e-01 : f32
    %138 = vector.broadcast %cst_76 : f32 to vector<32x2xf32>
    %139 = arith.mulf %137, %138 : vector<32x2xf32>
    %cst_77 = arith.constant dense<0xFF800000> : vector<32xf32>
    %140 = vector.multi_reduction <maximumf>, %139, %cst_77 [1] : vector<32x2xf32> to vector<32xf32>
    %141 = vector.shape_cast %140 : vector<32xf32> to vector<32x1xf32>
    %142 = vector.broadcast %141 : vector<32x1xf32> to vector<32x2xf32>
    %143 = arith.subf %139, %142 : vector<32x2xf32>
    %144 = math.exp %143 : vector<32x2xf32>
    %cst_78 = arith.constant dense<0.000000e+00> : vector<32xf32>
    %145 = vector.multi_reduction <add>, %144, %cst_78 [1] : vector<32x2xf32> to vector<32xf32>
    %146 = vector.shape_cast %145 : vector<32xf32> to vector<32x1xf32>
    %147 = tpu.reciprocal %146 {approx = true} : vector<32x1xf32> -> vector<32x1xf32>
    %148 = vector.broadcast %147 : vector<32x1xf32> to vector<32x2xf32>
    %149 = arith.mulf %144, %148 : vector<32x2xf32>
    %c1 = arith.constant 1 : index
    %c0_79 = arith.constant 0 : index
    %c0_80 = arith.constant 0 : index
    %150 = vector.load %arg20[%c1, %c0_79, %c0_80] : memref<2x32x2xf32, #tpu.memory_space<vmem>>, vector<1x32x2xf32>
    %151 = vector.shape_cast %150 : vector<1x32x2xf32> to vector<32x2xf32>
    %152 = vector.shape_cast %149 : vector<32x2xf32> to vector<1x32x2xf32>
    tpu.vector_store %arg20[%c1, %c0_79, %c0_80], %152 {strides = array<i32>} : memref<2x32x2xf32, #tpu.memory_space<vmem>>, vector<1x32x2xf32>,
    return
  }
}

</mosaic_0001>

<llo_original>
// kernel: tpu_custom_call.1
$region0: #{tpu_custom_call.1}
  #allocation0 [shape = 'u32[]', space=smem, size = 0x4, offset = 0x4, fixed_abs, tag = 'smem constant byte address 0x4 - core index']
  #allocation1 [shape = 'u32[144,128]{1,0:T(1,128)}', space=vmem, size = 0x12000, scoped, tag = 'internal scratch']
  %s0 = inlined_call_operand.hbm [shape: f32[32,512], index: 0, kind: input, shape index: {}]
  %s1 = inlined_call_operand.hbm [shape: f32[32,128], index: 1, kind: input, shape index: {}]
  %s2 = inlined_call_operand.vmem [shape: f32[1,128], index: 2, kind: input, shape index: {}]
  %s3 = inlined_call_operand.hbm [shape: f32[128,128], index: 3, kind: input, shape index: {}]
  %s4 = inlined_call_operand.vmem [shape: f32[1,128], index: 4, kind: input, shape index: {}]
  %s5 = inlined_call_operand.hbm [shape: f32[32,256], index: 5, kind: input, shape index: {}]
  %s6 = inlined_call_operand.hbm [shape: f32[32,128], index: 6, kind: input, shape index: {}]
  %s7 = inlined_call_operand.vmem [shape: f32[1,128], index: 7, kind: input, shape index: {}]
  %s8 = inlined_call_operand.hbm [shape: f32[128,128], index: 8, kind: input, shape index: {}]
  %s9 = inlined_call_operand.vmem [shape: f32[1,128], index: 9, kind: input, shape index: {}]
  %s10 = inlined_call_operand.vmem [shape: f32[32,128], index: 10, kind: input, shape index: {}]
  %s11 = inlined_call_operand.hbm [shape: f32[32,128], index: 11, kind: input, shape index: {}]
  %s12 = inlined_call_operand.vmem [shape: f32[1,128], index: 12, kind: input, shape index: {}]
  %s13 = inlined_call_operand.hbm [shape: f32[128,128], index: 13, kind: input, shape index: {}]
  %s14 = inlined_call_operand.vmem [shape: f32[1,128], index: 14, kind: input, shape index: {}]
  %s15 = inlined_call_operand.hbm [shape: f32[32,256], index: 15, kind: input, shape index: {}]
  %s16 = inlined_call_operand.hbm [shape: f32[32,128], index: 16, kind: input, shape index: {}]
  %s17 = inlined_call_operand.vmem [shape: f32[1,128], index: 17, kind: input, shape index: {}]
  %s18 = inlined_call_operand.hbm [shape: f32[128,128], index: 18, kind: input, shape index: {}]
  %s19 = inlined_call_operand.vmem [shape: f32[1,128], index: 19, kind: input, shape index: {}]
  %s20 = inlined_call_operand.vmem [shape: f32[2,32,2], index: 20, kind: output, shape index: {}]
  %s21 = sld [smem:[#allocation0]]
  $region134: #{tpu_custom_call.1} parent=0
    _
  %s23 = ssub.s32 1, %s21
  %s24 = scalar_select 0, %s23, %s21
  $region1: #{tpu_custom_call.1} parent=0
    #allocation2 [shape = 'u8[65536]{0}', space=vmem, size = 0x10000, scoped, tag = 'input window, operand 0, single buffered']
    #allocation3 [shape = 's32[1]{0}', space=sflag, size = 0x4, scoped, tag = 'scoped memory for tpu_custom_call.1']
    #allocation4 [shape = 'u8[16384]{0}', space=vmem, size = 0x4000, scoped, tag = 'input window, operand 1, single buffered']
    #allocation5 [shape = 's32[1]{0}', space=sflag, size = 0x4, scoped, tag = 'scoped memory for tpu_custom_call.1']
    #allocation6 [shape = 'u8[65536]{0}', space=vmem, size = 0x10000, scoped, tag = 'input window, operand 3, single buffered']
    #allocation7 [shape = 'u8[32768]{0}', space=vmem, size = 0x8000, scoped, tag = 'input window, operand 5, single buffered']
    #allocation8 [shape = 's32[1]{0}', space=sflag, size = 0x4, scoped, tag = 'scoped memory for tpu_custom_call.1']
    #allocation9 [shape = 'u8[16384]{0}', space=vmem, size = 0x4000, scoped, tag = 'input window, operand 6, single buffered']
    #allocation10 [shape = 'u8[65536]{0}', space=vmem, size = 0x10000, scoped, tag = 'input window, operand 8, single buffered']
    #allocation11 [shape = 's32[1]{0}', space=sflag, size = 0x4, scoped, tag = 'scoped memory for tpu_custom_call.1']
    #allocation12 [shape = 'u8[16384]{0}', space=vmem, size = 0x4000, scoped, tag = 'input window, operand 11, single buffered']
    #allocation13 [shape = 'u8[65536]{0}', space=vmem, size = 0x10000, scoped, tag = 'input window, operand 13, single buffered']
    #allocation14 [shape = 's32[1]{0}', space=sflag, size = 0x4, scoped, tag = 'scoped memory for tpu_custom_call.1']
    #allocation15 [shape = 'u8[32768]{0}', space=vmem, size = 0x8000, scoped, tag = 'input window, operand 15, single buffered']
    #allocation16 [shape = 'u8[16384]{0}', space=vmem, size = 0x4000, scoped, tag = 'input window, operand 16, single buffered']
    #allocation17 [shape = 's32[1]{0}', space=sflag, size = 0x4, scoped, tag = 'scoped memory for tpu_custom_call.1']
    #allocation18 [shape = 'u8[65536]{0}', space=vmem, size = 0x10000, scoped, tag = 'input window, operand 18, single buffered']
    %25 = vsyncpa [#allocation3], 0
    %26 = vsyncpa [#allocation5], 0
    %27 = vsyncpa [#allocation8], 0
    %28 = vsyncpa [#allocation11], 0
    %29 = vsyncpa [#allocation14], 0
    %30 = vsyncpa [#allocation17], 0
    // Predicated region
    $region2: #{tpu_custom_call.1} parent=1 // pred_check
      _
    $region3: #{tpu_custom_call.1} parent=1 // pred_check_branch
      %32 = sbr.rel (0) target = $region5
    $region4: #{tpu_custom_call.1} parent=1 // pred_region
      %s34 = ssub.s32 2048, 2048
      %35 = vsyncadd [#allocation3], %s34
      %s36 = sshll.u32 [#allocation2], 4
      %s37 = int_to_ptr.vmem [resolvable:$true] %s36
      %42 = dma.hbm_to_vmem [thread:$0]  %s0, 2048, %s37, [#allocation3], 512, 512, 32
    $region5: #{tpu_custom_call.1} parent=1 // pred_fallthru
      _
    // Predicated region
    $region6: #{tpu_custom_call.1} parent=1 // pred_check
      _
    $region7: #{tpu_custom_call.1} parent=1 // pred_check_branch
      %44 = sbr.rel (0) target = $region9
    $region8: #{tpu_custom_call.1} parent=1 // pred_region
      %s46 = ssub.s32 512, 512
      %47 = vsyncadd [#allocation5], %s46
      %s48 = sshll.u32 [#allocation4], 4
      %s49 = int_to_ptr.vmem [resolvable:$true] %s48
      %54 = dma.hbm_to_vmem [thread:$0]  %s1, 512, %s49, [#allocation5], 128, 128, 8
    $region9: #{tpu_custom_call.1} parent=1 // pred_fallthru
      _
    // Predicated region
    $region10: #{tpu_custom_call.1} parent=1 // pred_check
      _
    $region11: #{tpu_custom_call.1} parent=1 // pred_check_branch
      %56 = sbr.rel (0) target = $region13
    $region12: #{tpu_custom_call.1} parent=1 // pred_region
      _
    $region13: #{tpu_custom_call.1} parent=1 // pred_fallthru
      _
    // Predicated region
    $region14: #{tpu_custom_call.1} parent=1 // pred_check
      _
    $region15: #{tpu_custom_call.1} parent=1 // pred_check_branch
      %58 = sbr.rel (0) target = $region17
    $region16: #{tpu_custom_call.1} parent=1 // pred_region
      %s60 = ssub.s32 2048, 2048
      %61 = vsyncadd [#allocation5], %s60
      %s62 = sshll.u32 [#allocation6], 4
      %s63 = int_to_ptr.vmem [resolvable:$true] %s62
      %68 = dma.hbm_to_vmem [thread:$0]  %s3, 2048, %s63, [#allocation5], 128, 128, 8
    $region17: #{tpu_custom_call.1} parent=1 // pred_fallthru
      _
    // Predicated region
    $region18: #{tpu_custom_call.1} parent=1 // pred_check
      _
    $region19: #{tpu_custom_call.1} parent=1 // pred_check_branch
      %70 = sbr.rel (0) target = $region21
    $region20: #{tpu_custom_call.1} parent=1 // pred_region
      _
    $region21: #{tpu_custom_call.1} parent=1 // pred_fallthru
      _
    // Predicated region
    $region22: #{tpu_custom_call.1} parent=1 // pred_check
      _
    $region23: #{tpu_custom_call.1} parent=1 // pred_check_branch
      %72 = sbr.rel (0) target = $region25
    $region24: #{tpu_custom_call.1} parent=1 // pred_region
      %s74 = ssub.s32 1024, 1024
      %75 = vsyncadd [#allocation8], %s74
      %s76 = sshll.u32 [#allocation7], 4
      %s77 = int_to_ptr.vmem [resolvable:$true] %s76
      %82 = dma.hbm_to_vmem [thread:$0]  %s5, 1024, %s77, [#allocation8], 256, 256, 16
    $region25: #{tpu_custom_call.1} parent=1 // pred_fallthru
      _
    // Predicated region
    $region26: #{tpu_custom_call.1} parent=1 // pred_check
      _
    $region27: #{tpu_custom_call.1} parent=1 // pred_check_branch
      %84 = sbr.rel (0) target = $region29
    $region28: #{tpu_custom_call.1} parent=1 // pred_region
      %s86 = ssub.s32 512, 512
      %87 = vsyncadd [#allocation8], %s86
      %s88 = sshll.u32 [#allocation9], 4
      %s89 = int_to_ptr.vmem [resolvable:$true] %s88
      %94 = dma.hbm_to_vmem [thread:$0]  %s6, 512, %s89, [#allocation8], 128, 128, 8
    $region29: #{tpu_custom_call.1} parent=1 // pred_fallthru
      _
    // Predicated region
    $region30: #{tpu_custom_call.1} parent=1 // pred_check
      _
    $region31: #{tpu_custom_call.1} parent=1 // pred_check_branch
      %96 = sbr.rel (0) target = $region33
    $region32: #{tpu_custom_call.1} parent=1 // pred_region
      _
    $region33: #{tpu_custom_call.1} parent=1 // pred_fallthru
      _
    // Predicated region
    $region34: #{tpu_custom_call.1} parent=1 // pred_check
      _
    $region35: #{tpu_custom_call.1} parent=1 // pred_check_branch
      %98 = sbr.rel (0) target = $region37
    $region36: #{tpu_custom_call.1} parent=1 // pred_region
      %s100 = ssub.s32 2048, 2048
      %101 = vsyncadd [#allocation11], %s100
      %s102 = sshll.u32 [#allocation10], 4
      %s103 = int_to_ptr.vmem [resolvable:$true] %s102
      %108 = dma.hbm_to_vmem [thread:$0]  %s8, 2048, %s103, [#allocation11], 128, 128, 8
    $region37: #{tpu_custom_call.1} parent=1 // pred_fallthru
      _
    // Predicated region
    $region38: #{tpu_custom_call.1} parent=1 // pred_check
      _
    $region39: #{tpu_custom_call.1} parent=1 // pred_check_branch
      %110 = sbr.rel (0) target = $region41
    $region40: #{tpu_custom_call.1} parent=1 // pred_region
      _
    $region41: #{tpu_custom_call.1} parent=1 // pred_fallthru
      _
    // Predicated region
    $region42: #{tpu_custom_call.1} parent=1 // pred_check
      _
    $region43: #{tpu_custom_call.1} parent=1 // pred_check_branch
      %112 = sbr.rel (0) target = $region45
    $region44: #{tpu_custom_call.1} parent=1 // pred_region
      _
    $region45: #{tpu_custom_call.1} parent=1 // pred_fallthru
      _
    // Predicated region
    $region46: #{tpu_custom_call.1} parent=1 // pred_check
      _
    $region47: #{tpu_custom_call.1} parent=1 // pred_check_branch
      %114 = sbr.rel (0) target = $region49
    $region48: #{tpu_custom_call.1} parent=1 // pred_region
      %s116 = ssub.s32 512, 512
      %117 = vsyncadd [#allocation11], %s116
      %s118 = sshll.u32 [#allocation12], 4
      %s119 = int_to_ptr.vmem [resolvable:$true] %s118
      %124 = dma.hbm_to_vmem [thread:$0]  %s11, 512, %s119, [#allocation11], 128, 128, 8
    $region49: #{tpu_custom_call.1} parent=1 // pred_fallthru
      _
    // Predicated region
    $region50: #{tpu_custom_call.1} parent=1 // pred_check
      _
    $region51: #{tpu_custom_call.1} parent=1 // pred_check_branch
      %126 = sbr.rel (0) target = $region53
    $region52: #{tpu_custom_call.1} parent=1 // pred_region
      _
    $region53: #{tpu_custom_call.1} parent=1 // pred_fallthru
      _
    // Predicated region
    $region54: #{tpu_custom_call.1} parent=1 // pred_check
      _
    $region55: #{tpu_custom_call.1} parent=1 // pred_check_branch
      %128 = sbr.rel (0) target = $region57
    $region56: #{tpu_custom_call.1} parent=1 // pred_region
      %s130 = ssub.s32 2048, 2048
      %131 = vsyncadd [#allocation14], %s130
      %s132 = sshll.u32 [#allocation13], 4
      %s133 = int_to_ptr.vmem [resolvable:$true] %s132
      %138 = dma.hbm_to_vmem [thread:$0]  %s13, 2048, %s133, [#allocation14], 128, 128, 8
    $region57: #{tpu_custom_call.1} parent=1 // pred_fallthru
      _
    // Predicated region
    $region58: #{tpu_custom_call.1} parent=1 // pred_check
      _
    $region59: #{tpu_custom_call.1} parent=1 // pred_check_branch
      %140 = sbr.rel (0) target = $region61
    $region60: #{tpu_custom_call.1} parent=1 // pred_region
      _
    $region61: #{tpu_custom_call.1} parent=1 // pred_fallthru
      _
    // Predicated region
    $region62: #{tpu_custom_call.1} parent=1 // pred_check
      _
    $region63: #{tpu_custom_call.1} parent=1 // pred_check_branch
      %142 = sbr.rel (0) target = $region65
    $region64: #{tpu_custom_call.1} parent=1 // pred_region
      %s144 = ssub.s32 1024, 1024
      %145 = vsyncadd [#allocation14], %s144
      %s146 = sshll.u32 [#allocation15], 4
      %s147 = int_to_ptr.vmem [resolvable:$true] %s146
      %152 = dma.hbm_to_vmem [thread:$0]  %s15, 1024, %s147, [#allocation14], 256, 256, 16
    $region65: #{tpu_custom_call.1} parent=1 // pred_fallthru
      _
    // Predicated region
    $region66: #{tpu_custom_call.1} parent=1 // pred_check
      _
    $region67: #{tpu_custom_call.1} parent=1 // pred_check_branch
      %154 = sbr.rel (0) target = $region69
    $region68: #{tpu_custom_call.1} parent=1 // pred_region
      %s156 = ssub.s32 512, 512
      %157 = vsyncadd [#allocation17], %s156
      %s158 = sshll.u32 [#allocation16], 4
      %s159 = int_to_ptr.vmem [resolvable:$true] %s158
      %164 = dma.hbm_to_vmem [thread:$0]  %s16, 512, %s159, [#allocation17], 128, 128, 8
    $region69: #{tpu_custom_call.1} parent=1 // pred_fallthru
      _
    // Predicated region
    $region70: #{tpu_custom_call.1} parent=1 // pred_check
      _
    $region71: #{tpu_custom_call.1} parent=1 // pred_check_branch
      %166 = sbr.rel (0) target = $region73
    $region72: #{tpu_custom_call.1} parent=1 // pred_region
      _
    $region73: #{tpu_custom_call.1} parent=1 // pred_fallthru
      _
    // Predicated region
    $region74: #{tpu_custom_call.1} parent=1 // pred_check
      _
    $region75: #{tpu_custom_call.1} parent=1 // pred_check_branch
      %168 = sbr.rel (0) target = $region77
    $region76: #{tpu_custom_call.1} parent=1 // pred_region
      %s170 = ssub.s32 2048, 2048
      %171 = vsyncadd [#allocation17], %s170
      %s172 = sshll.u32 [#allocation18], 4
      %s173 = int_to_ptr.vmem [resolvable:$true] %s172
      %178 = dma.hbm_to_vmem [thread:$0]  %s18, 2048, %s173, [#allocation17], 128, 128, 8
    $region77: #{tpu_custom_call.1} parent=1 // pred_fallthru
      _
    // Predicated region
    $region78: #{tpu_custom_call.1} parent=1 // pred_check
      _
    $region79: #{tpu_custom_call.1} parent=1 // pred_check_branch
      %180 = sbr.rel (0) target = $region81
    $region80: #{tpu_custom_call.1} parent=1 // pred_region
      _
    $region81: #{tpu_custom_call.1} parent=1 // pred_fallthru
      _
    // Predicated region
    $region82: #{tpu_custom_call.1} parent=1 // pred_check
      _
    $region83: #{tpu_custom_call.1} parent=1 // pred_check_branch
      %182 = sbr.rel (0) target = $region85
    $region84: #{tpu_custom_call.1} parent=1 // pred_region
      %183 = dma.done [#allocation3], 2048
    $region85: #{tpu_custom_call.1} parent=1 // pred_fallthru
      _
    // Predicated region
    $region86: #{tpu_custom_call.1} parent=1 // pred_check
      _
    $region87: #{tpu_custom_call.1} parent=1 // pred_check_branch
      %185 = sbr.rel (0) target = $region89
    $region88: #{tpu_custom_call.1} parent=1 // pred_region
      %186 = dma.done [#allocation5], 512
    $region89: #{tpu_custom_call.1} parent=1 // pred_fallthru
      _
    // Predicated region
    $region90: #{tpu_custom_call.1} parent=1 // pred_check
      _
    $region91: #{tpu_custom_call.1} parent=1 // pred_check_branch
      %188 = sbr.rel (0) target = $region93
    $region92: #{tpu_custom_call.1} parent=1 // pred_region
      %189 = dma.done [#allocation5], 2048
    $region93: #{tpu_custom_call.1} parent=1 // pred_fallthru
      _
    // Predicated region
    $region94: #{tpu_custom_call.1} parent=1 // pred_check
      _
    $region95: #{tpu_custom_call.1} parent=1 // pred_check_branch
      %191 = sbr.rel (0) target = $region97
    $region96: #{tpu_custom_call.1} parent=1 // pred_region
      %192 = dma.done [#allocation8], 1024
    $region97: #{tpu_custom_call.1} parent=1 // pred_fallthru
      _
    // Predicated region
    $region98: #{tpu_custom_call.1} parent=1 // pred_check
      _
    $region99: #{tpu_custom_call.1} parent=1 // pred_check_branch
      %194 = sbr.rel (0) target = $region101
    $region100: #{tpu_custom_call.1} parent=1 // pred_region
      %195 = dma.done [#allocation8], 512
    $region101: #{tpu_custom_call.1} parent=1 // pred_fallthru
      _
    // Predicated region
    $region102: #{tpu_custom_call.1} parent=1 // pred_check
      _
    $region103: #{tpu_custom_call.1} parent=1 // pred_check_branch
      %197 = sbr.rel (0) target = $region105
    $region104: #{tpu_custom_call.1} parent=1 // pred_region
      %198 = dma.done [#allocation11], 2048
    $region105: #{tpu_custom_call.1} parent=1 // pred_fallthru
      _
    // Predicated region
    $region106: #{tpu_custom_call.1} parent=1 // pred_check
      _
    $region107: #{tpu_custom_call.1} parent=1 // pred_check_branch
      %200 = sbr.rel (0) target = $region109
    $region108: #{tpu_custom_call.1} parent=1 // pred_region
      %201 = dma.done [#allocation11], 512
    $region109: #{tpu_custom_call.1} parent=1 // pred_fallthru
      _
    // Predicated region
    $region110: #{tpu_custom_call.1} parent=1 // pred_check
      _
    $region111: #{tpu_custom_call.1} parent=1 // pred_check_branch
      %203 = sbr.rel (0) target = $region113
    $region112: #{tpu_custom_call.1} parent=1 // pred_region
      %204 = dma.done [#allocation14], 2048
    $region113: #{tpu_custom_call.1} parent=1 // pred_fallthru
      _
    // Predicated region
    $region114: #{tpu_custom_call.1} parent=1 // pred_check
      _
    $region115: #{tpu_custom_call.1} parent=1 // pred_check_branch
      %206 = sbr.rel (0) target = $region117
    $region116: #{tpu_custom_call.1} parent=1 // pred_region
      %207 = dma.done [#allocation14], 1024
    $region117: #{tpu_custom_call.1} parent=1 // pred_fallthru
      _
    // Predicated region
    $region118: #{tpu_custom_call.1} parent=1 // pred_check
      _
    $region119: #{tpu_custom_call.1} parent=1 // pred_check_branch
      %209 = sbr.rel (0) target = $region121
    $region120: #{tpu_custom_call.1} parent=1 // pred_region
      %210 = dma.done [#allocation17], 512
    $region121: #{tpu_custom_call.1} parent=1 // pred_fallthru
      _
    // Predicated region
    $region122: #{tpu_custom_call.1} parent=1 // pred_check
      _
    $region123: #{tpu_custom_call.1} parent=1 // pred_check_branch
      %212 = sbr.rel (0) target = $region125
    $region124: #{tpu_custom_call.1} parent=1 // pred_region
      %213 = dma.done [#allocation17], 2048
    $region125: #{tpu_custom_call.1} parent=1 // pred_fallthru
      _
    %v214 = vld [vmem:[#allocation2] sm:$0xff]
    %v215 = vld [vmem:[#allocation2 + $0x8] sm:$0xff]
    %v216 = vld [vmem:[#allocation2 + $0x10] sm:$0xff]
    %v217 = vld [vmem:[#allocation2 + $0x18] sm:$0xff]
    %v218 = vld [vmem:[#allocation2 + $0x20] sm:$0xff]
    %v219 = vld [vmem:[#allocation2 + $0x28] sm:$0xff]
    %v220 = vld [vmem:[#allocation2 + $0x30] sm:$0xff]
    %v221 = vld [vmem:[#allocation2 + $0x38] sm:$0xff]
    %v222 = vld [vmem:[#allocation2 + $0x40] sm:$0xff]
    %v223 = vld [vmem:[#allocation2 + $0x48] sm:$0xff]
    %v224 = vld [vmem:[#allocation2 + $0x50] sm:$0xff]
    %v225 = vld [vmem:[#allocation2 + $0x58] sm:$0xff]
    %v226 = vld [vmem:[#allocation2 + $0x60] sm:$0xff]
    %v227 = vld [vmem:[#allocation2 + $0x68] sm:$0xff]
    %v228 = vld [vmem:[#allocation2 + $0x70] sm:$0xff]
    %v229 = vld [vmem:[#allocation2 + $0x78] sm:$0xff]
    %230 = vmatprep.subr.mxu0 %v215
    %231 = vmatpush1.xpose.msra.mxu0 %v214
    %232 = vmatprep.subr.mxu0 %v219
    %233 = vmatpush1.xpose.msra.mxu0 %v218
    %234 = vmatprep.subr.mxu0 %v223
    %235 = vmatpush1.xpose.msra.mxu0 %v222
    %236 = vmatprep.subr.mxu0 %v227
    %237 = vmatpush1.xpose.msra.mxu0 %v226
    %238 = vmatprep.subr.mxu0 0.0
    %239 = vmatpush1.xpose.msra.mxu0 0.0
    %240 = vmatprep.subr.mxu0 0.0
    %241 = vmatpush1.xpose.msra.mxu0 0.0
    %242 = vmatprep.subr.mxu0 0.0
    %243 = vmatpush1.xpose.msra.mxu0 0.0
    %244 = vmatprep.subr.mxu0 0.0
    %245 = vmatpush1.xpose.msra.mxu0 0.0
    %246 = vmatprep.subr.mxu0 0.0
    %247 = vmatpush1.xpose.msra.mxu0 0.0
    %248 = vmatprep.subr.mxu0 0.0
    %249 = vmatpush1.xpose.msra.mxu0 0.0
    %250 = vmatprep.subr.mxu0 0.0
    %251 = vmatpush1.xpose.msra.mxu0 0.0
    %252 = vmatprep.subr.mxu0 0.0
    %253 = vmatpush1.xpose.msra.mxu0 0.0
    %254 = vmatprep.subr.mxu0 0.0
    %255 = vmatpush1.xpose.msra.mxu0 0.0
    %256 = vmatprep.subr.mxu0 0.0
    %257 = vmatpush1.xpose.msra.mxu0 0.0
    %258 = vmatprep.subr.mxu0 0.0
    %259 = vmatpush1.xpose.msra.mxu0 0.0
    %260 = vmatprep.subr.mxu0 0.0
    %261 = vmatpush1.xpose.msra.mxu0 0.0
    %262 = vmatprep.subr.mxu0 0.0
    %263 = vmatpush1.xpose.msra.mxu0 0.0
    %264 = vmatprep.subr.mxu0 0.0
    %265 = vmatpush1.xpose.msra.mxu0 0.0
    %266 = vmatprep.subr.mxu0 0.0
    %267 = vmatpush1.xpose.msra.mxu0 0.0
    %268 = vmatprep.subr.mxu0 0.0
    %269 = vmatpush1.xpose.msra.mxu0 0.0
    %270 = vmatprep.subr.mxu0 0.0
    %271 = vmatpush1.xpose.msra.mxu0 0.0
    %272 = vmatprep.subr.mxu0 0.0
    %273 = vmatpush1.xpose.msra.mxu0 0.0
    %274 = vmatprep.subr.mxu0 0.0
    %275 = vmatpush1.xpose.msra.mxu0 0.0
    %276 = vmatprep.subr.mxu0 0.0
    %277 = vmatpush1.xpose.msra.mxu0 0.0
    %278 = vmatprep.subr.mxu0 0.0
    %279 = vmatpush1.xpose.msra.mxu0 0.0
    %280 = vmatprep.subr.mxu0 0.0
    %281 = vmatpush1.xpose.msra.mxu0 0.0
    %282 = vmatprep.subr.mxu0 0.0
    %283 = vmatpush1.xpose.msra.mxu0 0.0
    %284 = vmatprep.subr.mxu0 0.0
    %285 = vmatpush1.xpose.msra.mxu0 0.0
    %286 = vmatprep.subr.mxu0 0.0
    %287 = vmatpush1.xpose.msra.mxu0 0.0
    %288 = vmatprep.subr.mxu0 0.0
    %289 = vmatpush1.xpose.msra.mxu0 0.0
    %290 = vmatprep.subr.mxu0 0.0
    %291 = vmatpush1.xpose.msra.mxu0 0.0
    %292 = vmatprep.subr.mxu0 0.0
    %293 = vmatpush1.xpose.msra.mxu0 0.0
    %294 = vmatprep.mubr.f32.mxu0 %v215
    %295 = vmatmul.mubr.f32.gmra.mrb[0].mxu0 %v214
    %v296 = vpop.f32.mrb[0].mxu0
    %v297 = vadd.f32 0.0, %v296
    %v298 = vpop.f32.mrb[0].mxu0
    %299 = vmatprep.mubr.f32.mxu0 %v219
    %300 = vmatmul.mubr.f32.gmra.mrb[0].mxu0 %v218
    %v301 = vpop.f32.mrb[0].mxu0
    %v302 = vadd.f32 0.0, %v301
    %v303 = vpop.f32.mrb[0].mxu0
    %304 = vmatprep.mubr.f32.mxu0 %v223
    %305 = vmatmul.mubr.f32.gmra.mrb[0].mxu0 %v222
    %v306 = vpop.f32.mrb[0].mxu0
    %v307 = vadd.f32 0.0, %v306
    %v308 = vpop.f32.mrb[0].mxu0
    %309 = vmatprep.mubr.f32.mxu0 %v227
    %310 = vmatmul.mubr.f32.gmra.mrb[0].mxu0 %v226
    %v311 = vpop.f32.mrb[0].mxu0
    %v312 = vadd.f32 0.0, %v311
    %v313 = vpop.f32.mrb[0].mxu0
    %314 = vdwg.mxu0
    %315 = vmatprep.subr.mxu0 %v217
    %316 = vmatpush1.xpose.msra.mxu0 %v216
    %317 = vmatprep.subr.mxu0 %v221
    %318 = vmatpush1.xpose.msra.mxu0 %v220
    %319 = vmatprep.subr.mxu0 %v225
    %320 = vmatpush1.xpose.msra.mxu0 %v224
    %321 = vmatprep.subr.mxu0 %v229
    %322 = vmatpush1.xpose.msra.mxu0 %v228
    %323 = vmatprep.subr.mxu0 0.0
    %324 = vmatpush1.xpose.msra.mxu0 0.0
    %325 = vmatprep.subr.mxu0 0.0
    %326 = vmatpush1.xpose.msra.mxu0 0.0
    %327 = vmatprep.subr.mxu0 0.0
    %328 = vmatpush1.xpose.msra.mxu0 0.0
    %329 = vmatprep.subr.mxu0 0.0
    %330 = vmatpush1.xpose.msra.mxu0 0.0
    %331 = vmatprep.subr.mxu0 0.0
    %332 = vmatpush1.xpose.msra.mxu0 0.0
    %333 = vmatprep.subr.mxu0 0.0
    %334 = vmatpush1.xpose.msra.mxu0 0.0
    %335 = vmatprep.subr.mxu0 0.0
    %336 = vmatpush1.xpose.msra.mxu0 0.0
    %337 = vmatprep.subr.mxu0 0.0
    %338 = vmatpush1.xpose.msra.mxu0 0.0
    %339 = vmatprep.subr.mxu0 0.0
    %340 = vmatpush1.xpose.msra.mxu0 0.0
    %341 = vmatprep.subr.mxu0 0.0
    %342 = vmatpush1.xpose.msra.mxu0 0.0
    %343 = vmatprep.subr.mxu0 0.0
    %344 = vmatpush1.xpose.msra.mxu0 0.0
    %345 = vmatprep.subr.mxu0 0.0
    %346 = vmatpush1.xpose.msra.mxu0 0.0
    %347 = vmatprep.subr.mxu0 0.0
    %348 = vmatpush1.xpose.msra.mxu0 0.0
    %349 = vmatprep.subr.mxu0 0.0
    %350 = vmatpush1.xpose.msra.mxu0 0.0
    %351 = vmatprep.subr.mxu0 0.0
    %352 = vmatpush1.xpose.msra.mxu0 0.0
    %353 = vmatprep.subr.mxu0 0.0
    %354 = vmatpush1.xpose.msra.mxu0 0.0
    %355 = vmatprep.subr.mxu0 0.0
    %356 = vmatpush1.xpose.msra.mxu0 0.0
    %357 = vmatprep.subr.mxu0 0.0
    %358 = vmatpush1.xpose.msra.mxu0 0.0
    %359 = vmatprep.subr.mxu0 0.0
    %360 = vmatpush1.xpose.msra.mxu0 0.0
    %361 = vmatprep.subr.mxu0 0.0
    %362 = vmatpush1.xpose.msra.mxu0 0.0
    %363 = vmatprep.subr.mxu0 0.0
    %364 = vmatpush1.xpose.msra.mxu0 0.0
    %365 = vmatprep.subr.mxu0 0.0
    %366 = vmatpush1.xpose.msra.mxu0 0.0
    %367 = vmatprep.subr.mxu0 0.0
    %368 = vmatpush1.xpose.msra.mxu0 0.0
    %369 = vmatprep.subr.mxu0 0.0
    %370 = vmatpush1.xpose.msra.mxu0 0.0
    %371 = vmatprep.subr.mxu0 0.0
    %372 = vmatpush1.xpose.msra.mxu0 0.0
    %373 = vmatprep.subr.mxu0 0.0
    %374 = vmatpush1.xpose.msra.mxu0 0.0
    %375 = vmatprep.subr.mxu0 0.0
    %376 = vmatpush1.xpose.msra.mxu0 0.0
    %377 = vmatprep.subr.mxu0 0.0
    %378 = vmatpush1.xpose.msra.mxu0 0.0
    %379 = vmatprep.mubr.f32.mxu0 %v217
    %380 = vmatmul.mubr.f32.gmra.mrb[0].mxu0 %v216
    %v381 = vpop.f32.mrb[0].mxu0
    %v382 = vadd.f32 %v297, %v381
    %v383 = vpop.f32.mrb[0].mxu0
    %384 = vmatprep.mubr.f32.mxu0 %v221
    %385 = vmatmul.mubr.f32.gmra.mrb[0].mxu0 %v220
    %v386 = vpop.f32.mrb[0].mxu0
    %v387 = vadd.f32 %v302, %v386
    %v388 = vpop.f32.mrb[0].mxu0
    %389 = vmatprep.mubr.f32.mxu0 %v225
    %390 = vmatmul.mubr.f32.gmra.mrb[0].mxu0 %v224
    %v391 = vpop.f32.mrb[0].mxu0
    %v392 = vadd.f32 %v307, %v391
    %v393 = vpop.f32.mrb[0].mxu0
    %394 = vmatprep.mubr.f32.mxu0 %v229
    %395 = vmatmul.mubr.f32.gmra.mrb[0].mxu0 %v228
    %v396 = vpop.f32.mrb[0].mxu0
    %v397 = vadd.f32 %v312, %v396
    %v398 = vpop.f32.mrb[0].mxu0
    %399 = vdwg.mxu0
    %v400 = vld [vmem:[#allocation4] sm:$0xff]
    %v401 = vld [vmem:[#allocation4 + $0x8] sm:$0xff]
    %v402 = vld [vmem:[#allocation4 + $0x10] sm:$0xff]
    %v403 = vld [vmem:[#allocation4 + $0x18] sm:$0xff]
    %v404 = vld [vmem:[%s2] sm:$0x1]
    %v406 = vlaneseq
    %v407 = vshrl.u32 %v406, 7
    %v408 = vsub.s32 0, %v407
    %v409 = vrot.slane %v404, %v408
    %vm411 = vcmask 261120
    %v413 = vsel %vm411, %v382, 0
    %v416 = vsel %vm411, %v387, 0
    %v419 = vsel %vm411, %v392, 0
    %v422 = vsel %vm411, %v397, 0
    %424 = vmatprep.subr.mxu0 0.0
    %425 = vmatpush1.msra.mxu0 %v400
    %426 = vmatprep.subr.mxu0 0.0
    %427 = vmatpush1.msra.mxu0 %v401
    %428 = vmatprep.subr.mxu0 0.0
    %429 = vmatpush1.msra.mxu0 %v402
    %430 = vmatprep.subr.mxu0 0.0
    %431 = vmatpush1.msra.mxu0 %v403
    %432 = vmatprep.subr.mxu0 0.0
    %433 = vmatpush1.msra.mxu0 0.0
    %434 = vmatprep.subr.mxu0 0.0
    %435 = vmatpush1.msra.mxu0 0.0
    %436 = vmatprep.subr.mxu0 0.0
    %437 = vmatpush1.msra.mxu0 0.0
    %438 = vmatprep.subr.mxu0 0.0
    %439 = vmatpush1.msra.mxu0 0.0
    %440 = vmatprep.subr.mxu0 0.0
    %441 = vmatpush1.msra.mxu0 0.0
    %442 = vmatprep.subr.mxu0 0.0
    %443 = vmatpush1.msra.mxu0 0.0
    %444 = vmatprep.subr.mxu0 0.0
    %445 = vmatpush1.msra.mxu0 0.0
    %446 = vmatprep.subr.mxu0 0.0
    %447 = vmatpush1.msra.mxu0 0.0
    %448 = vmatprep.subr.mxu0 0.0
    %449 = vmatpush1.msra.mxu0 0.0
    %450 = vmatprep.subr.mxu0 0.0
    %451 = vmatpush1.msra.mxu0 0.0
    %452 = vmatprep.subr.mxu0 0.0
    %453 = vmatpush1.msra.mxu0 0.0
    %454 = vmatprep.subr.mxu0 0.0
    %455 = vmatpush1.msra.mxu0 0.0
    %456 = vmatprep.subr.mxu0 0.0
    %457 = vmatpush1.msra.mxu0 0.0
    %458 = vmatprep.subr.mxu0 0.0
    %459 = vmatpush1.msra.mxu0 0.0
    %460 = vmatprep.subr.mxu0 0.0
    %461 = vmatpush1.msra.mxu0 0.0
    %462 = vmatprep.subr.mxu0 0.0
    %463 = vmatpush1.msra.mxu0 0.0
    %464 = vmatprep.subr.mxu0 0.0
    %465 = vmatpush1.msra.mxu0 0.0
    %466 = vmatprep.subr.mxu0 0.0
    %467 = vmatpush1.msra.mxu0 0.0
    %468 = vmatprep.subr.mxu0 0.0
    %469 = vmatpush1.msra.mxu0 0.0
    %470 = vmatprep.subr.mxu0 0.0
    %471 = vmatpush1.msra.mxu0 0.0
    %472 = vmatprep.subr.mxu0 0.0
    %473 = vmatpush1.msra.mxu0 0.0
    %474 = vmatprep.subr.mxu0 0.0
    %475 = vmatpush1.msra.mxu0 0.0
    %476 = vmatprep.subr.mxu0 0.0
    %477 = vmatpush1.msra.mxu0 0.0
    %478 = vmatprep.subr.mxu0 0.0
    %479 = vmatpush1.msra.mxu0 0.0
    %480 = vmatprep.subr.mxu0 0.0
    %481 = vmatpush1.msra.mxu0 0.0
    %482 = vmatprep.subr.mxu0 0.0
    %483 = vmatpush1.msra.mxu0 0.0
    %484 = vmatprep.subr.mxu0 0.0
    %485 = vmatpush1.msra.mxu0 0.0
    %486 = vmatprep.subr.mxu0 0.0
    %487 = vmatpush1.msra.mxu0 0.0
    %488 = vmatprep.mubr.f32.mxu0 0.0
    %489 = vmatmul.mubr.f32.gmra.mrb[0].mxu0 %v413
    %v490 = vpop.f32.mrb[0].mxu0
    %v491 = vadd.f32 %v409, %v490
    %v492 = vpop.f32.mrb[0].mxu0
    %493 = vmatprep.mubr.f32.mxu0 0.0
    %494 = vmatmul.mubr.f32.gmra.mrb[0].mxu0 %v416
    %v495 = vpop.f32.mrb[0].mxu0
    %v496 = vadd.f32 %v409, %v495
    %v497 = vpop.f32.mrb[0].mxu0
    %498 = vmatprep.mubr.f32.mxu0 0.0
    %499 = vmatmul.mubr.f32.gmra.mrb[0].mxu0 %v419
    %v500 = vpop.f32.mrb[0].mxu0
    %v501 = vadd.f32 %v409, %v500
    %v502 = vpop.f32.mrb[0].mxu0
    %503 = vmatprep.mubr.f32.mxu0 0.0
    %504 = vmatmul.mubr.f32.gmra.mrb[0].mxu0 %v422
    %v505 = vpop.f32.mrb[0].mxu0
    %v506 = vadd.f32 %v409, %v505
    %v507 = vpop.f32.mrb[0].mxu0
    %508 = vdwg.mxu0
    %v509 = vmax.f32 %v491, 0.0
    %v510 = vmax.f32 %v496, 0.0
    %v511 = vmax.f32 %v501, 0.0
    %v512 = vmax.f32 %v506, 0.0
    %v513 = vld [vmem:[#allocation6] sm:$0xff]
    %v514 = vld [vmem:[#allocation6 + $0x8] sm:$0xff]
    %v515 = vld [vmem:[#allocation6 + $0x10] sm:$0xff]
    %v516 = vld [vmem:[#allocation6 + $0x18] sm:$0xff]
    %v517 = vld [vmem:[#allocation6 + $0x20] sm:$0xff]
    %v518 = vld [vmem:[#allocation6 + $0x28] sm:$0xff]
    %v519 = vld [vmem:[#allocation6 + $0x30] sm:$0xff]
    %v520 = vld [vmem:[#allocation6 + $0x38] sm:$0xff]
    %v521 = vld [vmem:[#allocation6 + $0x40] sm:$0xff]
    %v522 = vld [vmem:[#allocation6 + $0x48] sm:$0xff]
    %v523 = vld [vmem:[#allocation6 + $0x50] sm:$0xff]
    %v524 = vld [vmem:[#allocation6 + $0x58] sm:$0xff]
    %v525 = vld [vmem:[#allocation6 + $0x60] sm:$0xff]
    %v526 = vld [vmem:[#allocation6 + $0x68] sm:$0xff]
    %v527 = vld [vmem:[#allocation6 + $0x70] sm:$0xff]
    %v528 = vld [vmem:[#allocation6 + $0x78] sm:$0xff]
    %v529 = vld [vmem:[%s4] sm:$0x1]
    %v531 = vlaneseq
    %v532 = vshrl.u32 %v531, 7
    %v533 = vsub.s32 0, %v532
    %v534 = vrot.slane %v529, %v533
    %536 = vmatprep.subr.mxu0 0.0
    %537 = vmatpush1.msra.mxu0 %v513
    %538 = vmatprep.subr.mxu0 0.0
    %539 = vmatpush1.msra.mxu0 %v514
    %540 = vmatprep.subr.mxu0 0.0
    %541 = vmatpush1.msra.mxu0 %v515
    %542 = vmatprep.subr.mxu0 0.0
    %543 = vmatpush1.msra.mxu0 %v516
    %544 = vmatprep.subr.mxu0 0.0
    %545 = vmatpush1.msra.mxu0 %v517
    %546 = vmatprep.subr.mxu0 0.0
    %547 = vmatpush1.msra.mxu0 %v518
    %548 = vmatprep.subr.mxu0 0.0
    %549 = vmatpush1.msra.mxu0 %v519
    %550 = vmatprep.subr.mxu0 0.0
    %551 = vmatpush1.msra.mxu0 %v520
    %552 = vmatprep.subr.mxu0 0.0
    %553 = vmatpush1.msra.mxu0 %v521
    %554 = vmatprep.subr.mxu0 0.0
    %555 = vmatpush1.msra.mxu0 %v522
    %556 = vmatprep.subr.mxu0 0.0
    %557 = vmatpush1.msra.mxu0 %v523
    %558 = vmatprep.subr.mxu0 0.0
    %559 = vmatpush1.msra.mxu0 %v524
    %560 = vmatprep.subr.mxu0 0.0
    %561 = vmatpush1.msra.mxu0 %v525
    %562 = vmatprep.subr.mxu0 0.0
    %563 = vmatpush1.msra.mxu0 %v526
    %564 = vmatprep.subr.mxu0 0.0
    %565 = vmatpush1.msra.mxu0 %v527
    %566 = vmatprep.subr.mxu0 0.0
    %567 = vmatpush1.msra.mxu0 %v528
    %568 = vmatprep.subr.mxu0 0.0
    %569 = vmatpush1.msra.mxu0 0.0
    %570 = vmatprep.subr.mxu0 0.0
    %571 = vmatpush1.msra.mxu0 0.0
    %572 = vmatprep.subr.mxu0 0.0
    %573 = vmatpush1.msra.mxu0 0.0
    %574 = vmatprep.subr.mxu0 0.0
    %575 = vmatpush1.msra.mxu0 0.0
    %576 = vmatprep.subr.mxu0 0.0
    %577 = vmatpush1.msra.mxu0 0.0
    %578 = vmatprep.subr.mxu0 0.0
    %579 = vmatpush1.msra.mxu0 0.0
    %580 = vmatprep.subr.mxu0 0.0
    %581 = vmatpush1.msra.mxu0 0.0
    %582 = vmatprep.subr.mxu0 0.0
    %583 = vmatpush1.msra.mxu0 0.0
    %584 = vmatprep.subr.mxu0 0.0
    %585 = vmatpush1.msra.mxu0 0.0
    %586 = vmatprep.subr.mxu0 0.0
    %587 = vmatpush1.msra.mxu0 0.0
    %588 = vmatprep.subr.mxu0 0.0
    %589 = vmatpush1.msra.mxu0 0.0
    %590 = vmatprep.subr.mxu0 0.0
    %591 = vmatpush1.msra.mxu0 0.0
    %592 = vmatprep.subr.mxu0 0.0
    %593 = vmatpush1.msra.mxu0 0.0
    %594 = vmatprep.subr.mxu0 0.0
    %595 = vmatpush1.msra.mxu0 0.0
    %596 = vmatprep.subr.mxu0 0.0
    %597 = vmatpush1.msra.mxu0 0.0
    %598 = vmatprep.subr.mxu0 0.0
    %599 = vmatpush1.msra.mxu0 0.0
    %600 = vmatprep.mubr.f32.mxu0 0.0
    %601 = vmatmul.mubr.f32.gmra.mrb[0].mxu0 %v509
    %v602 = vpop.f32.mrb[0].mxu0
    %v603 = vadd.f32 %v534, %v602
    %v604 = vpop.f32.mrb[0].mxu0
    %605 = vmatprep.mubr.f32.mxu0 0.0
    %606 = vmatmul.mubr.f32.gmra.mrb[0].mxu0 %v510
    %v607 = vpop.f32.mrb[0].mxu0
    %v608 = vadd.f32 %v534, %v607
    %v609 = vpop.f32.mrb[0].mxu0
    %610 = vmatprep.mubr.f32.mxu0 0.0
    %611 = vmatmul.mubr.f32.gmra.mrb[0].mxu0 %v511
    %v612 = vpop.f32.mrb[0].mxu0
    %v613 = vadd.f32 %v534, %v612
    %v614 = vpop.f32.mrb[0].mxu0
    %615 = vmatprep.mubr.f32.mxu0 0.0
    %616 = vmatmul.mubr.f32.gmra.mrb[0].mxu0 %v512
    %v617 = vpop.f32.mrb[0].mxu0
    %v618 = vadd.f32 %v534, %v617
    %v619 = vpop.f32.mrb[0].mxu0
    %620 = vdwg.mxu0
    %v621 = vmul.f32 %v603, %v603
    %v622 = vmul.f32 %v608, %v608
    %v623 = vmul.f32 %v613, %v613
    %v624 = vmul.f32 %v618, %v618
    %625 = vadd.xlane.f32.xlu0 %v621
    %v626 = vpop.xlane.xlu0 %625
    %627 = vadd.xlane.f32.xlu0 %v622
    %v628 = vpop.xlane.xlu0 %627
    %629 = vadd.xlane.f32.xlu0 %v623
    %v630 = vpop.xlane.xlu0 %629
    %631 = vadd.xlane.f32.xlu0 %v624
    %v632 = vpop.xlane.xlu0 %631
    %v633 = vadd.f32 %v626, 1e-12
    %v634 = vadd.f32 %v628, 1e-12
    %v635 = vadd.f32 %v630, 1e-12
    %v636 = vadd.f32 %v632, 1e-12
    %v637 = vrsqrt.pop %v633
    %v638 = vrsqrt.pop %v634
    %v639 = vrsqrt.pop %v635
    %v640 = vrsqrt.pop %v636
    %v641 = vmul.f32 %v603, %v637
    %v642 = vmul.f32 %v608, %v638
    %v643 = vmul.f32 %v613, %v639
    %v644 = vmul.f32 %v618, %v640
    %v645 = vld [vmem:[#allocation7] sm:$0xff]
    %v646 = vld [vmem:[#allocation7 + $0x8] sm:$0xff]
    %v647 = vld [vmem:[#allocation7 + $0x10] sm:$0xff]
    %v648 = vld [vmem:[#allocation7 + $0x18] sm:$0xff]
    %v649 = vld [vmem:[#allocation7 + $0x20] sm:$0xff]
    %v650 = vld [vmem:[#allocation7 + $0x28] sm:$0xff]
    %v651 = vld [vmem:[#allocation7 + $0x30] sm:$0xff]
    %v652 = vld [vmem:[#allocation7 + $0x38] sm:$0xff]
    %653 = vmatprep.subr.mxu0 %v646
    %654 = vmatpush1.xpose.msra.mxu0 %v645
    %655 = vmatprep.subr.mxu0 %v648
    %656 = vmatpush1.xpose.msra.mxu0 %v647
    %657 = vmatprep.subr.mxu0 %v650
    %658 = vmatpush1.xpose.msra.mxu0 %v649
    %659 = vmatprep.subr.mxu0 %v652
    %660 = vmatpush1.xpose.msra.mxu0 %v651
    %661 = vmatprep.subr.mxu0 0.0
    %662 = vmatpush1.xpose.msra.mxu0 0.0
    %663 = vmatprep.subr.mxu0 0.0
    %664 = vmatpush1.xpose.msra.mxu0 0.0
    %665 = vmatprep.subr.mxu0 0.0
    %666 = vmatpush1.xpose.msra.mxu0 0.0
    %667 = vmatprep.subr.mxu0 0.0
    %668 = vmatpush1.xpose.msra.mxu0 0.0
    %669 = vmatprep.subr.mxu0 0.0
    %670 = vmatpush1.xpose.msra.mxu0 0.0
    %671 = vmatprep.subr.mxu0 0.0
    %672 = vmatpush1.xpose.msra.mxu0 0.0
    %673 = vmatprep.subr.mxu0 0.0
    %674 = vmatpush1.xpose.msra.mxu0 0.0
    %675 = vmatprep.subr.mxu0 0.0
    %676 = vmatpush1.xpose.msra.mxu0 0.0
    %677 = vmatprep.subr.mxu0 0.0
    %678 = vmatpush1.xpose.msra.mxu0 0.0
    %679 = vmatprep.subr.mxu0 0.0
    %680 = vmatpush1.xpose.msra.mxu0 0.0
    %681 = vmatprep.subr.mxu0 0.0
    %682 = vmatpush1.xpose.msra.mxu0 0.0
    %683 = vmatprep.subr.mxu0 0.0
    %684 = vmatpush1.xpose.msra.mxu0 0.0
    %685 = vmatprep.subr.mxu0 0.0
    %686 = vmatpush1.xpose.msra.mxu0 0.0
    %687 = vmatprep.subr.mxu0 0.0
    %688 = vmatpush1.xpose.msra.mxu0 0.0
    %689 = vmatprep.subr.mxu0 0.0
    %690 = vmatpush1.xpose.msra.mxu0 0.0
    %691 = vmatprep.subr.mxu0 0.0
    %692 = vmatpush1.xpose.msra.mxu0 0.0
    %693 = vmatprep.subr.mxu0 0.0
    %694 = vmatpush1.xpose.msra.mxu0 0.0
    %695 = vmatprep.subr.mxu0 0.0
    %696 = vmatpush1.xpose.msra.mxu0 0.0
    %697 = vmatprep.subr.mxu0 0.0
    %698 = vmatpush1.xpose.msra.mxu0 0.0
    %699 = vmatprep.subr.mxu0 0.0
    %700 = vmatpush1.xpose.msra.mxu0 0.0
    %701 = vmatprep.subr.mxu0 0.0
    %702 = vmatpush1.xpose.msra.mxu0 0.0
    %703 = vmatprep.subr.mxu0 0.0
    %704 = vmatpush1.xpose.msra.mxu0 0.0
    %705 = vmatprep.subr.mxu0 0.0
    %706 = vmatpush1.xpose.msra.mxu0 0.0
    %707 = vmatprep.subr.mxu0 0.0
    %708 = vmatpush1.xpose.msra.mxu0 0.0
    %709 = vmatprep.subr.mxu0 0.0
    %710 = vmatpush1.xpose.msra.mxu0 0.0
    %711 = vmatprep.subr.mxu0 0.0
    %712 = vmatpush1.xpose.msra.mxu0 0.0
    %713 = vmatprep.subr.mxu0 0.0
    %714 = vmatpush1.xpose.msra.mxu0 0.0
    %715 = vmatprep.subr.mxu0 0.0
    %716 = vmatpush1.xpose.msra.mxu0 0.0
    %717 = vmatprep.mubr.f32.mxu0 %v646
    %718 = vmatmul.mubr.f32.gmra.mrb[0].mxu0 %v645
    %v719 = vpop.f32.mrb[0].mxu0
    %v720 = vadd.f32 0.0, %v719
    %v721 = vpop.f32.mrb[0].mxu0
    %722 = vmatprep.mubr.f32.mxu0 %v648
    %723 = vmatmul.mubr.f32.gmra.mrb[0].mxu0 %v647
    %v724 = vpop.f32.mrb[0].mxu0
    %v725 = vadd.f32 0.0, %v724
    %v726 = vpop.f32.mrb[0].mxu0
    %727 = vmatprep.mubr.f32.mxu0 %v650
    %728 = vmatmul.mubr.f32.gmra.mrb[0].mxu0 %v649
    %v729 = vpop.f32.mrb[0].mxu0
    %v730 = vadd.f32 0.0, %v729
    %v731 = vpop.f32.mrb[0].mxu0
    %732 = vmatprep.mubr.f32.mxu0 %v652
    %733 = vmatmul.mubr.f32.gmra.mrb[0].mxu0 %v651
    %v734 = vpop.f32.mrb[0].mxu0
    %v735 = vadd.f32 0.0, %v734
    %v736 = vpop.f32.mrb[0].mxu0
    %737 = vdwg.mxu0
    %v738 = vld [vmem:[#allocation9] sm:$0xff]
    %v739 = vld [vmem:[#allocation9 + $0x8] sm:$0xff]
    %v740 = vld [vmem:[#allocation9 + $0x10] sm:$0xff]
    %v741 = vld [vmem:[#allocation9 + $0x18] sm:$0xff]
    %v742 = vld [vmem:[%s7] sm:$0x1]
    %v744 = vlaneseq
    %v745 = vshrl.u32 %v744, 7
    %v746 = vsub.s32 0, %v745
    %v747 = vrot.slane %v742, %v746
    %v750 = vsel %vm411, %v720, 0
    %v753 = vsel %vm411, %v725, 0
    %v756 = vsel %vm411, %v730, 0
    %v759 = vsel %vm411, %v735, 0
    %761 = vmatprep.subr.mxu0 0.0
    %762 = vmatpush1.msra.mxu0 %v738
    %763 = vmatprep.subr.mxu0 0.0
    %764 = vmatpush1.msra.mxu0 %v739
    %765 = vmatprep.subr.mxu0 0.0
    %766 = vmatpush1.msra.mxu0 %v740
    %767 = vmatprep.subr.mxu0 0.0
    %768 = vmatpush1.msra.mxu0 %v741
    %769 = vmatprep.subr.mxu0 0.0
    %770 = vmatpush1.msra.mxu0 0.0
    %771 = vmatprep.subr.mxu0 0.0
    %772 = vmatpush1.msra.mxu0 0.0
    %773 = vmatprep.subr.mxu0 0.0
    %774 = vmatpush1.msra.mxu0 0.0
    %775 = vmatprep.subr.mxu0 0.0
    %776 = vmatpush1.msra.mxu0 0.0
    %777 = vmatprep.subr.mxu0 0.0
    %778 = vmatpush1.msra.mxu0 0.0
    %779 = vmatprep.subr.mxu0 0.0
    %780 = vmatpush1.msra.mxu0 0.0
    %781 = vmatprep.subr.mxu0 0.0
    %782 = vmatpush1.msra.mxu0 0.0
    %783 = vmatprep.subr.mxu0 0.0
    %784 = vmatpush1.msra.mxu0 0.0
    %785 = vmatprep.subr.mxu0 0.0
    %786 = vmatpush1.msra.mxu0 0.0
    %787 = vmatprep.subr.mxu0 0.0
    %788 = vmatpush1.msra.mxu0 0.0
    %789 = vmatprep.subr.mxu0 0.0
    %790 = vmatpush1.msra.mxu0 0.0
    %791 = vmatprep.subr.mxu0 0.0
    %792 = vmatpush1.msra.mxu0 0.0
    %793 = vmatprep.subr.mxu0 0.0
    %794 = vmatpush1.msra.mxu0 0.0
    %795 = vmatprep.subr.mxu0 0.0
    %796 = vmatpush1.msra.mxu0 0.0
    %797 = vmatprep.subr.mxu0 0.0
    %798 = vmatpush1.msra.mxu0 0.0
    %799 = vmatprep.subr.mxu0 0.0
    %800 = vmatpush1.msra.mxu0 0.0
    %801 = vmatprep.subr.mxu0 0.0
    %802 = vmatpush1.msra.mxu0 0.0
    %803 = vmatprep.subr.mxu0 0.0
    %804 = vmatpush1.msra.mxu0 0.0
    %805 = vmatprep.subr.mxu0 0.0
    %806 = vmatpush1.msra.mxu0 0.0
    %807 = vmatprep.subr.mxu0 0.0
    %808 = vmatpush1.msra.mxu0 0.0
    %809 = vmatprep.subr.mxu0 0.0
    %810 = vmatpush1.msra.mxu0 0.0
    %811 = vmatprep.subr.mxu0 0.0
    %812 = vmatpush1.msra.mxu0 0.0
    %813 = vmatprep.subr.mxu0 0.0
    %814 = vmatpush1.msra.mxu0 0.0
    %815 = vmatprep.subr.mxu0 0.0
    %816 = vmatpush1.msra.mxu0 0.0
    %817 = vmatprep.subr.mxu0 0.0
    %818 = vmatpush1.msra.mxu0 0.0
    %819 = vmatprep.subr.mxu0 0.0
    %820 = vmatpush1.msra.mxu0 0.0
    %821 = vmatprep.subr.mxu0 0.0
    %822 = vmatpush1.msra.mxu0 0.0
    %823 = vmatprep.subr.mxu0 0.0
    %824 = vmatpush1.msra.mxu0 0.0
    %825 = vmatprep.mubr.f32.mxu0 0.0
    %826 = vmatmul.mubr.f32.gmra.mrb[0].mxu0 %v750
    %v827 = vpop.f32.mrb[0].mxu0
    %v828 = vadd.f32 %v747, %v827
    %v829 = vpop.f32.mrb[0].mxu0
    %830 = vmatprep.mubr.f32.mxu0 0.0
    %831 = vmatmul.mubr.f32.gmra.mrb[0].mxu0 %v753
    %v832 = vpop.f32.mrb[0].mxu0
    %v833 = vadd.f32 %v747, %v832
    %v834 = vpop.f32.mrb[0].mxu0
    %835 = vmatprep.mubr.f32.mxu0 0.0
    %836 = vmatmul.mubr.f32.gmra.mrb[0].mxu0 %v756
    %v837 = vpop.f32.mrb[0].mxu0
    %v838 = vadd.f32 %v747, %v837
    %v839 = vpop.f32.mrb[0].mxu0
    %840 = vmatprep.mubr.f32.mxu0 0.0
    %841 = vmatmul.mubr.f32.gmra.mrb[0].mxu0 %v759
    %v842 = vpop.f32.mrb[0].mxu0
    %v843 = vadd.f32 %v747, %v842
    %v844 = vpop.f32.mrb[0].mxu0
    %845 = vdwg.mxu0
    %v846 = vmax.f32 %v828, 0.0
    %v847 = vmax.f32 %v833, 0.0
    %v848 = vmax.f32 %v838, 0.0
    %v849 = vmax.f32 %v843, 0.0
    %v850 = vld [vmem:[#allocation10] sm:$0xff]
    %v851 = vld [vmem:[#allocation10 + $0x8] sm:$0xff]
    %v852 = vld [vmem:[#allocation10 + $0x10] sm:$0xff]
    %v853 = vld [vmem:[#allocation10 + $0x18] sm:$0xff]
    %v854 = vld [vmem:[#allocation10 + $0x20] sm:$0xff]
    %v855 = vld [vmem:[#allocation10 + $0x28] sm:$0xff]
    %v856 = vld [vmem:[#allocation10 + $0x30] sm:$0xff]
    %v857 = vld [vmem:[#allocation10 + $0x38] sm:$0xff]
    %v858 = vld [vmem:[#allocation10 + $0x40] sm:$0xff]
    %v859 = vld [vmem:[#allocation10 + $0x48] sm:$0xff]
    %v860 = vld [vmem:[#allocation10 + $0x50] sm:$0xff]
    %v861 = vld [vmem:[#allocation10 + $0x58] sm:$0xff]
    %v862 = vld [vmem:[#allocation10 + $0x60] sm:$0xff]
    %v863 = vld [vmem:[#allocation10 + $0x68] sm:$0xff]
    %v864 = vld [vmem:[#allocation10 + $0x70] sm:$0xff]
    %v865 = vld [vmem:[#allocation10 + $0x78] sm:$0xff]
    %v866 = vld [vmem:[%s9] sm:$0x1]
    %v868 = vlaneseq
    %v869 = vshrl.u32 %v868, 7
    %v870 = vsub.s32 0, %v869
    %v871 = vrot.slane %v866, %v870
    %873 = vmatprep.subr.mxu0 0.0
    %874 = vmatpush1.msra.mxu0 %v850
    %875 = vmatprep.subr.mxu0 0.0
    %876 = vmatpush1.msra.mxu0 %v851
    %877 = vmatprep.subr.mxu0 0.0
    %878 = vmatpush1.msra.mxu0 %v852
    %879 = vmatprep.subr.mxu0 0.0
    %880 = vmatpush1.msra.mxu0 %v853
    %881 = vmatprep.subr.mxu0 0.0
    %882 = vmatpush1.msra.mxu0 %v854
    %883 = vmatprep.subr.mxu0 0.0
    %884 = vmatpush1.msra.mxu0 %v855
    %885 = vmatprep.subr.mxu0 0.0
    %886 = vmatpush1.msra.mxu0 %v856
    %887 = vmatprep.subr.mxu0 0.0
    %888 = vmatpush1.msra.mxu0 %v857
    %889 = vmatprep.subr.mxu0 0.0
    %890 = vmatpush1.msra.mxu0 %v858
    %891 = vmatprep.subr.mxu0 0.0
    %892 = vmatpush1.msra.mxu0 %v859
    %893 = vmatprep.subr.mxu0 0.0
    %894 = vmatpush1.msra.mxu0 %v860
    %895 = vmatprep.subr.mxu0 0.0
    %896 = vmatpush1.msra.mxu0 %v861
    %897 = vmatprep.subr.mxu0 0.0
    %898 = vmatpush1.msra.mxu0 %v862
    %899 = vmatprep.subr.mxu0 0.0
    %900 = vmatpush1.msra.mxu0 %v863
    %901 = vmatprep.subr.mxu0 0.0
    %902 = vmatpush1.msra.mxu0 %v864
    %903 = vmatprep.subr.mxu0 0.0
    %904 = vmatpush1.msra.mxu0 %v865
    %905 = vmatprep.subr.mxu0 0.0
    %906 = vmatpush1.msra.mxu0 0.0
    %907 = vmatprep.subr.mxu0 0.0
    %908 = vmatpush1.msra.mxu0 0.0
    %909 = vmatprep.subr.mxu0 0.0
    %910 = vmatpush1.msra.mxu0 0.0
    %911 = vmatprep.subr.mxu0 0.0
    %912 = vmatpush1.msra.mxu0 0.0
    %913 = vmatprep.subr.mxu0 0.0
    %914 = vmatpush1.msra.mxu0 0.0
    %915 = vmatprep.subr.mxu0 0.0
    %916 = vmatpush1.msra.mxu0 0.0
    %917 = vmatprep.subr.mxu0 0.0
    %918 = vmatpush1.msra.mxu0 0.0
    %919 = vmatprep.subr.mxu0 0.0
    %920 = vmatpush1.msra.mxu0 0.0
    %921 = vmatprep.subr.mxu0 0.0
    %922 = vmatpush1.msra.mxu0 0.0
    %923 = vmatprep.subr.mxu0 0.0
    %924 = vmatpush1.msra.mxu0 0.0
    %925 = vmatprep.subr.mxu0 0.0
    %926 = vmatpush1.msra.mxu0 0.0
    %927 = vmatprep.subr.mxu0 0.0
    %928 = vmatpush1.msra.mxu0 0.0
    %929 = vmatprep.subr.mxu0 0.0
    %930 = vmatpush1.msra.mxu0 0.0
    %931 = vmatprep.subr.mxu0 0.0
    %932 = vmatpush1.msra.mxu0 0.0
    %933 = vmatprep.subr.mxu0 0.0
    %934 = vmatpush1.msra.mxu0 0.0
    %935 = vmatprep.subr.mxu0 0.0
    %936 = vmatpush1.msra.mxu0 0.0
    %937 = vmatprep.mubr.f32.mxu0 0.0
    %938 = vmatmul.mubr.f32.gmra.mrb[0].mxu0 %v846
    %v939 = vpop.f32.mrb[0].mxu0
    %v940 = vadd.f32 %v871, %v939
    %v941 = vpop.f32.mrb[0].mxu0
    %942 = vmatprep.mubr.f32.mxu0 0.0
    %943 = vmatmul.mubr.f32.gmra.mrb[0].mxu0 %v847
    %v944 = vpop.f32.mrb[0].mxu0
    %v945 = vadd.f32 %v871, %v944
    %v946 = vpop.f32.mrb[0].mxu0
    %947 = vmatprep.mubr.f32.mxu0 0.0
    %948 = vmatmul.mubr.f32.gmra.mrb[0].mxu0 %v848
    %v949 = vpop.f32.mrb[0].mxu0
    %v950 = vadd.f32 %v871, %v949
    %v951 = vpop.f32.mrb[0].mxu0
    %952 = vmatprep.mubr.f32.mxu0 0.0
    %953 = vmatmul.mubr.f32.gmra.mrb[0].mxu0 %v849
    %v954 = vpop.f32.mrb[0].mxu0
    %v955 = vadd.f32 %v871, %v954
    %v956 = vpop.f32.mrb[0].mxu0
    %957 = vdwg.mxu0
    %v958 = vmul.f32 %v940, %v940
    %v959 = vmul.f32 %v945, %v945
    %v960 = vmul.f32 %v950, %v950
    %v961 = vmul.f32 %v955, %v955
    %962 = vadd.xlane.f32.xlu0 %v958
    %v963 = vpop.xlane.xlu0 %962
    %964 = vadd.xlane.f32.xlu0 %v959
    %v965 = vpop.xlane.xlu0 %964
    %966 = vadd.xlane.f32.xlu0 %v960
    %v967 = vpop.xlane.xlu0 %966
    %968 = vadd.xlane.f32.xlu0 %v961
    %v969 = vpop.xlane.xlu0 %968
    %v970 = vadd.f32 %v963, 1e-12
    %v971 = vadd.f32 %v965, 1e-12
    %v972 = vadd.f32 %v967, 1e-12
    %v973 = vadd.f32 %v969, 1e-12
    %v974 = vrsqrt.pop %v970
    %v975 = vrsqrt.pop %v971
    %v976 = vrsqrt.pop %v972
    %v977 = vrsqrt.pop %v973
    %v978 = vmul.f32 %v940, %v974
    %v979 = vmul.f32 %v945, %v975
    %v980 = vmul.f32 %v950, %v976
    %v981 = vmul.f32 %v955, %v977
    %v982 = vld [vmem:[%s10] sm:$0xff]
    %v983 = vld [vmem:[%s10 + $0x8] sm:$0xff]
    %v984 = vld [vmem:[%s10 + $0x10] sm:$0xff]
    %v985 = vld [vmem:[%s10 + $0x18] sm:$0xff]
    %986 = vmatprep.subr.mxu0 0.0
    %987 = vmatpush1.xpose.msra.mxu0 %v982
    %988 = vmatprep.subr.mxu0 0.0
    %989 = vmatpush1.xpose.msra.mxu0 %v983
    %990 = vmatprep.subr.mxu0 0.0
    %991 = vmatpush1.xpose.msra.mxu0 %v984
    %992 = vmatprep.subr.mxu0 0.0
    %993 = vmatpush1.xpose.msra.mxu0 %v985
    %994 = vmatprep.subr.mxu0 0.0
    %995 = vmatpush1.xpose.msra.mxu0 0.0
    %996 = vmatprep.subr.mxu0 0.0
    %997 = vmatpush1.xpose.msra.mxu0 0.0
    %998 = vmatprep.subr.mxu0 0.0
    %999 = vmatpush1.xpose.msra.mxu0 0.0
    %1000 = vmatprep.subr.mxu0 0.0
    %1001 = vmatpush1.xpose.msra.mxu0 0.0
    %1002 = vmatprep.subr.mxu0 0.0
    %1003 = vmatpush1.xpose.msra.mxu0 0.0
    %1004 = vmatprep.subr.mxu0 0.0
    %1005 = vmatpush1.xpose.msra.mxu0 0.0
    %1006 = vmatprep.subr.mxu0 0.0
    %1007 = vmatpush1.xpose.msra.mxu0 0.0
    %1008 = vmatprep.subr.mxu0 0.0
    %1009 = vmatpush1.xpose.msra.mxu0 0.0
    %1010 = vmatprep.subr.mxu0 0.0
    %1011 = vmatpush1.xpose.msra.mxu0 0.0
    %1012 = vmatprep.subr.mxu0 0.0
    %1013 = vmatpush1.xpose.msra.mxu0 0.0
    %1014 = vmatprep.subr.mxu0 0.0
    %1015 = vmatpush1.xpose.msra.mxu0 0.0
    %1016 = vmatprep.subr.mxu0 0.0
    %1017 = vmatpush1.xpose.msra.mxu0 0.0
    %1018 = vmatprep.subr.mxu0 0.0
    %1019 = vmatpush1.xpose.msra.mxu0 0.0
    %1020 = vmatprep.subr.mxu0 0.0
    %1021 = vmatpush1.xpose.msra.mxu0 0.0
    %1022 = vmatprep.subr.mxu0 0.0
    %1023 = vmatpush1.xpose.msra.mxu0 0.0
    %1024 = vmatprep.subr.mxu0 0.0
    %1025 = vmatpush1.xpose.msra.mxu0 0.0
    %1026 = vmatprep.subr.mxu0 0.0
    %1027 = vmatpush1.xpose.msra.mxu0 0.0
    %1028 = vmatprep.subr.mxu0 0.0
    %1029 = vmatpush1.xpose.msra.mxu0 0.0
    %1030 = vmatprep.subr.mxu0 0.0
    %1031 = vmatpush1.xpose.msra.mxu0 0.0
    %1032 = vmatprep.subr.mxu0 0.0
    %1033 = vmatpush1.xpose.msra.mxu0 0.0
    %1034 = vmatprep.subr.mxu0 0.0
    %1035 = vmatpush1.xpose.msra.mxu0 0.0
    %1036 = vmatprep.subr.mxu0 0.0
    %1037 = vmatpush1.xpose.msra.mxu0 0.0
    %1038 = vmatprep.subr.mxu0 0.0
    %1039 = vmatpush1.xpose.msra.mxu0 0.0
    %1040 = vmatprep.subr.mxu0 0.0
    %1041 = vmatpush1.xpose.msra.mxu0 0.0
    %1042 = vmatprep.subr.mxu0 0.0
    %1043 = vmatpush1.xpose.msra.mxu0 0.0
    %1044 = vmatprep.subr.mxu0 0.0
    %1045 = vmatpush1.xpose.msra.mxu0 0.0
    %1046 = vmatprep.subr.mxu0 0.0
    %1047 = vmatpush1.xpose.msra.mxu0 0.0
    %1048 = vmatprep.subr.mxu0 0.0
    %1049 = vmatpush1.xpose.msra.mxu0 0.0
    %1050 = vmatprep.mubr.f32.mxu0 0.0
    %1051 = vmatmul.mubr.f32.gmra.mrb[0].mxu0 %v982
    %v1052 = vpop.f32.mrb[0].mxu0
    %v1053 = vadd.f32 0.0, %v1052
    %v1054 = vpop.f32.mrb[0].mxu0
    %1055 = vmatprep.mubr.f32.mxu0 0.0
    %1056 = vmatmul.mubr.f32.gmra.mrb[0].mxu0 %v983
    %v1057 = vpop.f32.mrb[0].mxu0
    %v1058 = vadd.f32 0.0, %v1057
    %v1059 = vpop.f32.mrb[0].mxu0
    %1060 = vmatprep.mubr.f32.mxu0 0.0
    %1061 = vmatmul.mubr.f32.gmra.mrb[0].mxu0 %v984
    %v1062 = vpop.f32.mrb[0].mxu0
    %v1063 = vadd.f32 0.0, %v1062
    %v1064 = vpop.f32.mrb[0].mxu0
    %1065 = vmatprep.mubr.f32.mxu0 0.0
    %1066 = vmatmul.mubr.f32.gmra.mrb[0].mxu0 %v985
    %v1067 = vpop.f32.mrb[0].mxu0
    %v1068 = vadd.f32 0.0, %v1067
    %v1069 = vpop.f32.mrb[0].mxu0
    %1070 = vdwg.mxu0
    %v1071 = vld [vmem:[#allocation12] sm:$0xff]
    %v1072 = vld [vmem:[#allocation12 + $0x8] sm:$0xff]
    %v1073 = vld [vmem:[#allocation12 + $0x10] sm:$0xff]
    %v1074 = vld [vmem:[#allocation12 + $0x18] sm:$0xff]
    %v1075 = vld [vmem:[%s12] sm:$0x1]
    %v1077 = vlaneseq
    %v1078 = vshrl.u32 %v1077, 7
    %v1079 = vsub.s32 0, %v1078
    %v1080 = vrot.slane %v1075, %v1079
    %v1083 = vsel %vm411, %v1053, 0
    %v1086 = vsel %vm411, %v1058, 0
    %v1089 = vsel %vm411, %v1063, 0
    %v1092 = vsel %vm411, %v1068, 0
    %1094 = vmatprep.subr.mxu0 0.0
    %1095 = vmatpush1.msra.mxu0 %v1071
    %1096 = vmatprep.subr.mxu0 0.0
    %1097 = vmatpush1.msra.mxu0 %v1072
    %1098 = vmatprep.subr.mxu0 0.0
    %1099 = vmatpush1.msra.mxu0 %v1073
    %1100 = vmatprep.subr.mxu0 0.0
    %1101 = vmatpush1.msra.mxu0 %v1074
    %1102 = vmatprep.subr.mxu0 0.0
    %1103 = vmatpush1.msra.mxu0 0.0
    %1104 = vmatprep.subr.mxu0 0.0
    %1105 = vmatpush1.msra.mxu0 0.0
    %1106 = vmatprep.subr.mxu0 0.0
    %1107 = vmatpush1.msra.mxu0 0.0
    %1108 = vmatprep.subr.mxu0 0.0
    %1109 = vmatpush1.msra.mxu0 0.0
    %1110 = vmatprep.subr.mxu0 0.0
    %1111 = vmatpush1.msra.mxu0 0.0
    %1112 = vmatprep.subr.mxu0 0.0
    %1113 = vmatpush1.msra.mxu0 0.0
    %1114 = vmatprep.subr.mxu0 0.0
    %1115 = vmatpush1.msra.mxu0 0.0
    %1116 = vmatprep.subr.mxu0 0.0
    %1117 = vmatpush1.msra.mxu0 0.0
    %1118 = vmatprep.subr.mxu0 0.0
    %1119 = vmatpush1.msra.mxu0 0.0
    %1120 = vmatprep.subr.mxu0 0.0
    %1121 = vmatpush1.msra.mxu0 0.0
    %1122 = vmatprep.subr.mxu0 0.0
    %1123 = vmatpush1.msra.mxu0 0.0
    %1124 = vmatprep.subr.mxu0 0.0
    %1125 = vmatpush1.msra.mxu0 0.0
    %1126 = vmatprep.subr.mxu0 0.0
    %1127 = vmatpush1.msra.mxu0 0.0
    %1128 = vmatprep.subr.mxu0 0.0
    %1129 = vmatpush1.msra.mxu0 0.0
    %1130 = vmatprep.subr.mxu0 0.0
    %1131 = vmatpush1.msra.mxu0 0.0
    %1132 = vmatprep.subr.mxu0 0.0
    %1133 = vmatpush1.msra.mxu0 0.0
    %1134 = vmatprep.subr.mxu0 0.0
    %1135 = vmatpush1.msra.mxu0 0.0
    %1136 = vmatprep.subr.mxu0 0.0
    %1137 = vmatpush1.msra.mxu0 0.0
    %1138 = vmatprep.subr.mxu0 0.0
    %1139 = vmatpush1.msra.mxu0 0.0
    %1140 = vmatprep.subr.mxu0 0.0
    %1141 = vmatpush1.msra.mxu0 0.0
    %1142 = vmatprep.subr.mxu0 0.0
    %1143 = vmatpush1.msra.mxu0 0.0
    %1144 = vmatprep.subr.mxu0 0.0
    %1145 = vmatpush1.msra.mxu0 0.0
    %1146 = vmatprep.subr.mxu0 0.0
    %1147 = vmatpush1.msra.mxu0 0.0
    %1148 = vmatprep.subr.mxu0 0.0
    %1149 = vmatpush1.msra.mxu0 0.0
    %1150 = vmatprep.subr.mxu0 0.0
    %1151 = vmatpush1.msra.mxu0 0.0
    %1152 = vmatprep.subr.mxu0 0.0
    %1153 = vmatpush1.msra.mxu0 0.0
    %1154 = vmatprep.subr.mxu0 0.0
    %1155 = vmatpush1.msra.mxu0 0.0
    %1156 = vmatprep.subr.mxu0 0.0
    %1157 = vmatpush1.msra.mxu0 0.0
    %1158 = vmatprep.mubr.f32.mxu0 0.0
    %1159 = vmatmul.mubr.f32.gmra.mrb[0].mxu0 %v1083
    %v1160 = vpop.f32.mrb[0].mxu0
    %v1161 = vadd.f32 %v1080, %v1160
    %v1162 = vpop.f32.mrb[0].mxu0
    %1163 = vmatprep.mubr.f32.mxu0 0.0
    %1164 = vmatmul.mubr.f32.gmra.mrb[0].mxu0 %v1086
    %v1165 = vpop.f32.mrb[0].mxu0
    %v1166 = vadd.f32 %v1080, %v1165
    %v1167 = vpop.f32.mrb[0].mxu0
    %1168 = vmatprep.mubr.f32.mxu0 0.0
    %1169 = vmatmul.mubr.f32.gmra.mrb[0].mxu0 %v1089
    %v1170 = vpop.f32.mrb[0].mxu0
    %v1171 = vadd.f32 %v1080, %v1170
    %v1172 = vpop.f32.mrb[0].mxu0
    %1173 = vmatprep.mubr.f32.mxu0 0.0
    %1174 = vmatmul.mubr.f32.gmra.mrb[0].mxu0 %v1092
    %v1175 = vpop.f32.mrb[0].mxu0
    %v1176 = vadd.f32 %v1080, %v1175
    %v1177 = vpop.f32.mrb[0].mxu0
    %1178 = vdwg.mxu0
    %v1179 = vmax.f32 %v1161, 0.0
    %v1180 = vmax.f32 %v1166, 0.0
    %v1181 = vmax.f32 %v1171, 0.0
    %v1182 = vmax.f32 %v1176, 0.0
    %v1183 = vld [vmem:[#allocation13] sm:$0xff]
    %v1184 = vld [vmem:[#allocation13 + $0x8] sm:$0xff]
    %v1185 = vld [vmem:[#allocation13 + $0x10] sm:$0xff]
    %v1186 = vld [vmem:[#allocation13 + $0x18] sm:$0xff]
    %v1187 = vld [vmem:[#allocation13 + $0x20] sm:$0xff]
    %v1188 = vld [vmem:[#allocation13 + $0x28] sm:$0xff]
    %v1189 = vld [vmem:[#allocation13 + $0x30] sm:$0xff]
    %v1190 = vld [vmem:[#allocation13 + $0x38] sm:$0xff]
    %v1191 = vld [vmem:[#allocation13 + $0x40] sm:$0xff]
    %v1192 = vld [vmem:[#allocation13 + $0x48] sm:$0xff]
    %v1193 = vld [vmem:[#allocation13 + $0x50] sm:$0xff]
    %v1194 = vld [vmem:[#allocation13 + $0x58] sm:$0xff]
    %v1195 = vld [vmem:[#allocation13 + $0x60] sm:$0xff]
    %v1196 = vld [vmem:[#allocation13 + $0x68] sm:$0xff]
    %v1197 = vld [vmem:[#allocation13 + $0x70] sm:$0xff]
    %v1198 = vld [vmem:[#allocation13 + $0x78] sm:$0xff]
    %v1199 = vld [vmem:[%s14] sm:$0x1]
    %v1201 = vlaneseq
    %v1202 = vshrl.u32 %v1201, 7
    %v1203 = vsub.s32 0, %v1202
    %v1204 = vrot.slane %v1199, %v1203
    %1206 = vmatprep.subr.mxu0 0.0
    %1207 = vmatpush1.msra.mxu0 %v1183
    %1208 = vmatprep.subr.mxu0 0.0
    %1209 = vmatpush1.msra.mxu0 %v1184
    %1210 = vmatprep.subr.mxu0 0.0
    %1211 = vmatpush1.msra.mxu0 %v1185
    %1212 = vmatprep.subr.mxu0 0.0
    %1213 = vmatpush1.msra.mxu0 %v1186
    %1214 = vmatprep.subr.mxu0 0.0
    %1215 = vmatpush1.msra.mxu0 %v1187
    %1216 = vmatprep.subr.mxu0 0.0
    %1217 = vmatpush1.msra.mxu0 %v1188
    %1218 = vmatprep.subr.mxu0 0.0
    %1219 = vmatpush1.msra.mxu0 %v1189
    %1220 = vmatprep.subr.mxu0 0.0
    %1221 = vmatpush1.msra.mxu0 %v1190
    %1222 = vmatprep.subr.mxu0 0.0
    %1223 = vmatpush1.msra.mxu0 %v1191
    %1224 = vmatprep.subr.mxu0 0.0
    %1225 = vmatpush1.msra.mxu0 %v1192
    %1226 = vmatprep.subr.mxu0 0.0
    %1227 = vmatpush1.msra.mxu0 %v1193
    %1228 = vmatprep.subr.mxu0 0.0
    %1229 = vmatpush1.msra.mxu0 %v1194
    %1230 = vmatprep.subr.mxu0 0.0
    %1231 = vmatpush1.msra.mxu0 %v1195
    %1232 = vmatprep.subr.mxu0 0.0
    %1233 = vmatpush1.msra.mxu0 %v1196
    %1234 = vmatprep.subr.mxu0 0.0
    %1235 = vmatpush1.msra.mxu0 %v1197
    %1236 = vmatprep.subr.mxu0 0.0
    %1237 = vmatpush1.msra.mxu0 %v1198
    %1238 = vmatprep.subr.mxu0 0.0
    %1239 = vmatpush1.msra.mxu0 0.0
    %1240 = vmatprep.subr.mxu0 0.0
    %1241 = vmatpush1.msra.mxu0 0.0
    %1242 = vmatprep.subr.mxu0 0.0
    %1243 = vmatpush1.msra.mxu0 0.0
    %1244 = vmatprep.subr.mxu0 0.0
    %1245 = vmatpush1.msra.mxu0 0.0
    %1246 = vmatprep.subr.mxu0 0.0
    %1247 = vmatpush1.msra.mxu0 0.0
    %1248 = vmatprep.subr.mxu0 0.0
    %1249 = vmatpush1.msra.mxu0 0.0
    %1250 = vmatprep.subr.mxu0 0.0
    %1251 = vmatpush1.msra.mxu0 0.0
    %1252 = vmatprep.subr.mxu0 0.0
    %1253 = vmatpush1.msra.mxu0 0.0
    %1254 = vmatprep.subr.mxu0 0.0
    %1255 = vmatpush1.msra.mxu0 0.0
    %1256 = vmatprep.subr.mxu0 0.0
    %1257 = vmatpush1.msra.mxu0 0.0
    %1258 = vmatprep.subr.mxu0 0.0
    %1259 = vmatpush1.msra.mxu0 0.0
    %1260 = vmatprep.subr.mxu0 0.0
    %1261 = vmatpush1.msra.mxu0 0.0
    %1262 = vmatprep.subr.mxu0 0.0
    %1263 = vmatpush1.msra.mxu0 0.0
    %1264 = vmatprep.subr.mxu0 0.0
    %1265 = vmatpush1.msra.mxu0 0.0
    %1266 = vmatprep.subr.mxu0 0.0
    %1267 = vmatpush1.msra.mxu0 0.0
    %1268 = vmatprep.subr.mxu0 0.0
    %1269 = vmatpush1.msra.mxu0 0.0
    %1270 = vmatprep.mubr.f32.mxu0 0.0
    %1271 = vmatmul.mubr.f32.gmra.mrb[0].mxu0 %v1179
    %v1272 = vpop.f32.mrb[0].mxu0
    %v1273 = vadd.f32 %v1204, %v1272
    %v1274 = vpop.f32.mrb[0].mxu0
    %1275 = vmatprep.mubr.f32.mxu0 0.0
    %1276 = vmatmul.mubr.f32.gmra.mrb[0].mxu0 %v1180
    %v1277 = vpop.f32.mrb[0].mxu0
    %v1278 = vadd.f32 %v1204, %v1277
    %v1279 = vpop.f32.mrb[0].mxu0
    %1280 = vmatprep.mubr.f32.mxu0 0.0
    %1281 = vmatmul.mubr.f32.gmra.mrb[0].mxu0 %v1181
    %v1282 = vpop.f32.mrb[0].mxu0
    %v1283 = vadd.f32 %v1204, %v1282
    %v1284 = vpop.f32.mrb[0].mxu0
    %1285 = vmatprep.mubr.f32.mxu0 0.0
    %1286 = vmatmul.mubr.f32.gmra.mrb[0].mxu0 %v1182
    %v1287 = vpop.f32.mrb[0].mxu0
    %v1288 = vadd.f32 %v1204, %v1287
    %v1289 = vpop.f32.mrb[0].mxu0
    %1290 = vdwg.mxu0
    %v1291 = vmul.f32 %v1273, %v1273
    %v1292 = vmul.f32 %v1278, %v1278
    %v1293 = vmul.f32 %v1283, %v1283
    %v1294 = vmul.f32 %v1288, %v1288
    %1295 = vadd.xlane.f32.xlu0 %v1291
    %v1296 = vpop.xlane.xlu0 %1295
    %1297 = vadd.xlane.f32.xlu0 %v1292
    %v1298 = vpop.xlane.xlu0 %1297
    %1299 = vadd.xlane.f32.xlu0 %v1293
    %v1300 = vpop.xlane.xlu0 %1299
    %1301 = vadd.xlane.f32.xlu0 %v1294
    %v1302 = vpop.xlane.xlu0 %1301
    %v1303 = vadd.f32 %v1296, 1e-12
    %v1304 = vadd.f32 %v1298, 1e-12
    %v1305 = vadd.f32 %v1300, 1e-12
    %v1306 = vadd.f32 %v1302, 1e-12
    %v1307 = vrsqrt.pop %v1303
    %v1308 = vrsqrt.pop %v1304
    %v1309 = vrsqrt.pop %v1305
    %v1310 = vrsqrt.pop %v1306
    %v1311 = vmul.f32 %v1273, %v1307
    %v1312 = vmul.f32 %v1278, %v1308
    %v1313 = vmul.f32 %v1283, %v1309
    %v1314 = vmul.f32 %v1288, %v1310
    %v1315 = vld [vmem:[#allocation15] sm:$0xff]
    %v1316 = vld [vmem:[#allocation15 + $0x8] sm:$0xff]
    %v1317 = vld [vmem:[#allocation15 + $0x10] sm:$0xff]
    %v1318 = vld [vmem:[#allocation15 + $0x18] sm:$0xff]
    %v1319 = vld [vmem:[#allocation15 + $0x20] sm:$0xff]
    %v1320 = vld [vmem:[#allocation15 + $0x28] sm:$0xff]
    %v1321 = vld [vmem:[#allocation15 + $0x30] sm:$0xff]
    %v1322 = vld [vmem:[#allocation15 + $0x38] sm:$0xff]
    %1323 = vmatprep.subr.mxu0 %v1316
    %1324 = vmatpush1.xpose.msra.mxu0 %v1315
    %1325 = vmatprep.subr.mxu0 %v1318
    %1326 = vmatpush1.xpose.msra.mxu0 %v1317
    %1327 = vmatprep.subr.mxu0 %v1320
    %1328 = vmatpush1.xpose.msra.mxu0 %v1319
    %1329 = vmatprep.subr.mxu0 %v1322
    %1330 = vmatpush1.xpose.msra.mxu0 %v1321
    %1331 = vmatprep.subr.mxu0 0.0
    %1332 = vmatpush1.xpose.msra.mxu0 0.0
    %1333 = vmatprep.subr.mxu0 0.0
    %1334 = vmatpush1.xpose.msra.mxu0 0.0
    %1335 = vmatprep.subr.mxu0 0.0
    %1336 = vmatpush1.xpose.msra.mxu0 0.0
    %1337 = vmatprep.subr.mxu0 0.0
    %1338 = vmatpush1.xpose.msra.mxu0 0.0
    %1339 = vmatprep.subr.mxu0 0.0
    %1340 = vmatpush1.xpose.msra.mxu0 0.0
    %1341 = vmatprep.subr.mxu0 0.0
    %1342 = vmatpush1.xpose.msra.mxu0 0.0
    %1343 = vmatprep.subr.mxu0 0.0
    %1344 = vmatpush1.xpose.msra.mxu0 0.0
    %1345 = vmatprep.subr.mxu0 0.0
    %1346 = vmatpush1.xpose.msra.mxu0 0.0
    %1347 = vmatprep.subr.mxu0 0.0
    %1348 = vmatpush1.xpose.msra.mxu0 0.0
    %1349 = vmatprep.subr.mxu0 0.0
    %1350 = vmatpush1.xpose.msra.mxu0 0.0
    %1351 = vmatprep.subr.mxu0 0.0
    %1352 = vmatpush1.xpose.msra.mxu0 0.0
    %1353 = vmatprep.subr.mxu0 0.0
    %1354 = vmatpush1.xpose.msra.mxu0 0.0
    %1355 = vmatprep.subr.mxu0 0.0
    %1356 = vmatpush1.xpose.msra.mxu0 0.0
    %1357 = vmatprep.subr.mxu0 0.0
    %1358 = vmatpush1.xpose.msra.mxu0 0.0
    %1359 = vmatprep.subr.mxu0 0.0
    %1360 = vmatpush1.xpose.msra.mxu0 0.0
    %1361 = vmatprep.subr.mxu0 0.0
    %1362 = vmatpush1.xpose.msra.mxu0 0.0
    %1363 = vmatprep.subr.mxu0 0.0
    %1364 = vmatpush1.xpose.msra.mxu0 0.0
    %1365 = vmatprep.subr.mxu0 0.0
    %1366 = vmatpush1.xpose.msra.mxu0 0.0
    %1367 = vmatprep.subr.mxu0 0.0
    %1368 = vmatpush1.xpose.msra.mxu0 0.0
    %1369 = vmatprep.subr.mxu0 0.0
    %1370 = vmatpush1.xpose.msra.mxu0 0.0
    %1371 = vmatprep.subr.mxu0 0.0
    %1372 = vmatpush1.xpose.msra.mxu0 0.0
    %1373 = vmatprep.subr.mxu0 0.0
    %1374 = vmatpush1.xpose.msra.mxu0 0.0
    %1375 = vmatprep.subr.mxu0 0.0
    %1376 = vmatpush1.xpose.msra.mxu0 0.0
    %1377 = vmatprep.subr.mxu0 0.0
    %1378 = vmatpush1.xpose.msra.mxu0 0.0
    %1379 = vmatprep.subr.mxu0 0.0
    %1380 = vmatpush1.xpose.msra.mxu0 0.0
    %1381 = vmatprep.subr.mxu0 0.0
    %1382 = vmatpush1.xpose.msra.mxu0 0.0
    %1383 = vmatprep.subr.mxu0 0.0
    %1384 = vmatpush1.xpose.msra.mxu0 0.0
    %1385 = vmatprep.subr.mxu0 0.0
    %1386 = vmatpush1.xpose.msra.mxu0 0.0
    %1387 = vmatprep.mubr.f32.mxu0 %v1316
    %1388 = vmatmul.mubr.f32.gmra.mrb[0].mxu0 %v1315
    %v1389 = vpop.f32.mrb[0].mxu0
    %v1390 = vadd.f32 0.0, %v1389
    %v1391 = vpop.f32.mrb[0].mxu0
    %1392 = vmatprep.mubr.f32.mxu0 %v1318
    %1393 = vmatmul.mubr.f32.gmra.mrb[0].mxu0 %v1317
    %v1394 = vpop.f32.mrb[0].mxu0
    %v1395 = vadd.f32 0.0, %v1394
    %v1396 = vpop.f32.mrb[0].mxu0
    %1397 = vmatprep.mubr.f32.mxu0 %v1320
    %1398 = vmatmul.mubr.f32.gmra.mrb[0].mxu0 %v1319
    %v1399 = vpop.f32.mrb[0].mxu0
    %v1400 = vadd.f32 0.0, %v1399
    %v1401 = vpop.f32.mrb[0].mxu0
    %1402 = vmatprep.mubr.f32.mxu0 %v1322
    %1403 = vmatmul.mubr.f32.gmra.mrb[0].mxu0 %v1321
    %v1404 = vpop.f32.mrb[0].mxu0
    %v1405 = vadd.f32 0.0, %v1404
    %v1406 = vpop.f32.mrb[0].mxu0
    %1407 = vdwg.mxu0
    %v1408 = vld [vmem:[#allocation16] sm:$0xff]
    %v1409 = vld [vmem:[#allocation16 + $0x8] sm:$0xff]
    %v1410 = vld [vmem:[#allocation16 + $0x10] sm:$0xff]
    %v1411 = vld [vmem:[#allocation16 + $0x18] sm:$0xff]
    %v1412 = vld [vmem:[%s17] sm:$0x1]
    %v1414 = vlaneseq
    %v1415 = vshrl.u32 %v1414, 7
    %v1416 = vsub.s32 0, %v1415
    %v1417 = vrot.slane %v1412, %v1416
    %v1420 = vsel %vm411, %v1390, 0
    %v1423 = vsel %vm411, %v1395, 0
    %v1426 = vsel %vm411, %v1400, 0
    %v1429 = vsel %vm411, %v1405, 0
    %1431 = vmatprep.subr.mxu0 0.0
    %1432 = vmatpush1.msra.mxu0 %v1408
    %1433 = vmatprep.subr.mxu0 0.0
    %1434 = vmatpush1.msra.mxu0 %v1409
    %1435 = vmatprep.subr.mxu0 0.0
    %1436 = vmatpush1.msra.mxu0 %v1410
    %1437 = vmatprep.subr.mxu0 0.0
    %1438 = vmatpush1.msra.mxu0 %v1411
    %1439 = vmatprep.subr.mxu0 0.0
    %1440 = vmatpush1.msra.mxu0 0.0
    %1441 = vmatprep.subr.mxu0 0.0
    %1442 = vmatpush1.msra.mxu0 0.0
    %1443 = vmatprep.subr.mxu0 0.0
    %1444 = vmatpush1.msra.mxu0 0.0
    %1445 = vmatprep.subr.mxu0 0.0
    %1446 = vmatpush1.msra.mxu0 0.0
    %1447 = vmatprep.subr.mxu0 0.0
    %1448 = vmatpush1.msra.mxu0 0.0
    %1449 = vmatprep.subr.mxu0 0.0
    %1450 = vmatpush1.msra.mxu0 0.0
    %1451 = vmatprep.subr.mxu0 0.0
    %1452 = vmatpush1.msra.mxu0 0.0
    %1453 = vmatprep.subr.mxu0 0.0
    %1454 = vmatpush1.msra.mxu0 0.0
    %1455 = vmatprep.subr.mxu0 0.0
    %1456 = vmatpush1.msra.mxu0 0.0
    %1457 = vmatprep.subr.mxu0 0.0
    %1458 = vmatpush1.msra.mxu0 0.0
    %1459 = vmatprep.subr.mxu0 0.0
    %1460 = vmatpush1.msra.mxu0 0.0
    %1461 = vmatprep.subr.mxu0 0.0
    %1462 = vmatpush1.msra.mxu0 0.0
    %1463 = vmatprep.subr.mxu0 0.0
    %1464 = vmatpush1.msra.mxu0 0.0
    %1465 = vmatprep.subr.mxu0 0.0
    %1466 = vmatpush1.msra.mxu0 0.0
    %1467 = vmatprep.subr.mxu0 0.0
    %1468 = vmatpush1.msra.mxu0 0.0
    %1469 = vmatprep.subr.mxu0 0.0
    %1470 = vmatpush1.msra.mxu0 0.0
    %1471 = vmatprep.subr.mxu0 0.0
    %1472 = vmatpush1.msra.mxu0 0.0
    %1473 = vmatprep.subr.mxu0 0.0
    %1474 = vmatpush1.msra.mxu0 0.0
    %1475 = vmatprep.subr.mxu0 0.0
    %1476 = vmatpush1.msra.mxu0 0.0
    %1477 = vmatprep.subr.mxu0 0.0
    %1478 = vmatpush1.msra.mxu0 0.0
    %1479 = vmatprep.subr.mxu0 0.0
    %1480 = vmatpush1.msra.mxu0 0.0
    %1481 = vmatprep.subr.mxu0 0.0
    %1482 = vmatpush1.msra.mxu0 0.0
    %1483 = vmatprep.subr.mxu0 0.0
    %1484 = vmatpush1.msra.mxu0 0.0
    %1485 = vmatprep.subr.mxu0 0.0
    %1486 = vmatpush1.msra.mxu0 0.0
    %1487 = vmatprep.subr.mxu0 0.0
    %1488 = vmatpush1.msra.mxu0 0.0
    %1489 = vmatprep.subr.mxu0 0.0
    %1490 = vmatpush1.msra.mxu0 0.0
    %1491 = vmatprep.subr.mxu0 0.0
    %1492 = vmatpush1.msra.mxu0 0.0
    %1493 = vmatprep.subr.mxu0 0.0
    %1494 = vmatpush1.msra.mxu0 0.0
    %1495 = vmatprep.mubr.f32.mxu0 0.0
    %1496 = vmatmul.mubr.f32.gmra.mrb[0].mxu0 %v1420
    %v1497 = vpop.f32.mrb[0].mxu0
    %v1498 = vadd.f32 %v1417, %v1497
    %v1499 = vpop.f32.mrb[0].mxu0
    %1500 = vmatprep.mubr.f32.mxu0 0.0
    %1501 = vmatmul.mubr.f32.gmra.mrb[0].mxu0 %v1423
    %v1502 = vpop.f32.mrb[0].mxu0
    %v1503 = vadd.f32 %v1417, %v1502
    %v1504 = vpop.f32.mrb[0].mxu0
    %1505 = vmatprep.mubr.f32.mxu0 0.0
    %1506 = vmatmul.mubr.f32.gmra.mrb[0].mxu0 %v1426
    %v1507 = vpop.f32.mrb[0].mxu0
    %v1508 = vadd.f32 %v1417, %v1507
    %v1509 = vpop.f32.mrb[0].mxu0
    %1510 = vmatprep.mubr.f32.mxu0 0.0
    %1511 = vmatmul.mubr.f32.gmra.mrb[0].mxu0 %v1429
    %v1512 = vpop.f32.mrb[0].mxu0
    %v1513 = vadd.f32 %v1417, %v1512
    %v1514 = vpop.f32.mrb[0].mxu0
    %1515 = vdwg.mxu0
    %v1516 = vmax.f32 %v1498, 0.0
    %v1517 = vmax.f32 %v1503, 0.0
    %v1518 = vmax.f32 %v1508, 0.0
    %v1519 = vmax.f32 %v1513, 0.0
    %v1520 = vld [vmem:[#allocation18] sm:$0xff]
    %v1521 = vld [vmem:[#allocation18 + $0x8] sm:$0xff]
    %v1522 = vld [vmem:[#allocation18 + $0x10] sm:$0xff]
    %v1523 = vld [vmem:[#allocation18 + $0x18] sm:$0xff]
    %v1524 = vld [vmem:[#allocation18 + $0x20] sm:$0xff]
    %v1525 = vld [vmem:[#allocation18 + $0x28] sm:$0xff]
    %v1526 = vld [vmem:[#allocation18 + $0x30] sm:$0xff]
    %v1527 = vld [vmem:[#allocation18 + $0x38] sm:$0xff]
    %v1528 = vld [vmem:[#allocation18 + $0x40] sm:$0xff]
    %v1529 = vld [vmem:[#allocation18 + $0x48] sm:$0xff]
    %v1530 = vld [vmem:[#allocation18 + $0x50] sm:$0xff]
    %v1531 = vld [vmem:[#allocation18 + $0x58] sm:$0xff]
    %v1532 = vld [vmem:[#allocation18 + $0x60] sm:$0xff]
    %v1533 = vld [vmem:[#allocation18 + $0x68] sm:$0xff]
    %v1534 = vld [vmem:[#allocation18 + $0x70] sm:$0xff]
    %v1535 = vld [vmem:[#allocation18 + $0x78] sm:$0xff]
    %v1536 = vld [vmem:[%s19] sm:$0x1]
    %v1538 = vlaneseq
    %v1539 = vshrl.u32 %v1538, 7
    %v1540 = vsub.s32 0, %v1539
    %v1541 = vrot.slane %v1536, %v1540
    %1543 = vmatprep.subr.mxu0 0.0
    %1544 = vmatpush1.msra.mxu0 %v1520
    %1545 = vmatprep.subr.mxu0 0.0
    %1546 = vmatpush1.msra.mxu0 %v1521
    %1547 = vmatprep.subr.mxu0 0.0
    %1548 = vmatpush1.msra.mxu0 %v1522
    %1549 = vmatprep.subr.mxu0 0.0
    %1550 = vmatpush1.msra.mxu0 %v1523
    %1551 = vmatprep.subr.mxu0 0.0
    %1552 = vmatpush1.msra.mxu0 %v1524
    %1553 = vmatprep.subr.mxu0 0.0
    %1554 = vmatpush1.msra.mxu0 %v1525
    %1555 = vmatprep.subr.mxu0 0.0
    %1556 = vmatpush1.msra.mxu0 %v1526
    %1557 = vmatprep.subr.mxu0 0.0
    %1558 = vmatpush1.msra.mxu0 %v1527
    %1559 = vmatprep.subr.mxu0 0.0
    %1560 = vmatpush1.msra.mxu0 %v1528
    %1561 = vmatprep.subr.mxu0 0.0
    %1562 = vmatpush1.msra.mxu0 %v1529
    %1563 = vmatprep.subr.mxu0 0.0
    %1564 = vmatpush1.msra.mxu0 %v1530
    %1565 = vmatprep.subr.mxu0 0.0
    %1566 = vmatpush1.msra.mxu0 %v1531
    %1567 = vmatprep.subr.mxu0 0.0
    %1568 = vmatpush1.msra.mxu0 %v1532
    %1569 = vmatprep.subr.mxu0 0.0
    %1570 = vmatpush1.msra.mxu0 %v1533
    %1571 = vmatprep.subr.mxu0 0.0
    %1572 = vmatpush1.msra.mxu0 %v1534
    %1573 = vmatprep.subr.mxu0 0.0
    %1574 = vmatpush1.msra.mxu0 %v1535
    %1575 = vmatprep.subr.mxu0 0.0
    %1576 = vmatpush1.msra.mxu0 0.0
    %1577 = vmatprep.subr.mxu0 0.0
    %1578 = vmatpush1.msra.mxu0 0.0
    %1579 = vmatprep.subr.mxu0 0.0
    %1580 = vmatpush1.msra.mxu0 0.0
    %1581 = vmatprep.subr.mxu0 0.0
    %1582 = vmatpush1.msra.mxu0 0.0
    %1583 = vmatprep.subr.mxu0 0.0
    %1584 = vmatpush1.msra.mxu0 0.0
    %1585 = vmatprep.subr.mxu0 0.0
    %1586 = vmatpush1.msra.mxu0 0.0
    %1587 = vmatprep.subr.mxu0 0.0
    %1588 = vmatpush1.msra.mxu0 0.0
    %1589 = vmatprep.subr.mxu0 0.0
    %1590 = vmatpush1.msra.mxu0 0.0
    %1591 = vmatprep.subr.mxu0 0.0
    %1592 = vmatpush1.msra.mxu0 0.0
    %1593 = vmatprep.subr.mxu0 0.0
    %1594 = vmatpush1.msra.mxu0 0.0
    %1595 = vmatprep.subr.mxu0 0.0
    %1596 = vmatpush1.msra.mxu0 0.0
    %1597 = vmatprep.subr.mxu0 0.0
    %1598 = vmatpush1.msra.mxu0 0.0
    %1599 = vmatprep.subr.mxu0 0.0
    %1600 = vmatpush1.msra.mxu0 0.0
    %1601 = vmatprep.subr.mxu0 0.0
    %1602 = vmatpush1.msra.mxu0 0.0
    %1603 = vmatprep.subr.mxu0 0.0
    %1604 = vmatpush1.msra.mxu0 0.0
    %1605 = vmatprep.subr.mxu0 0.0
    %1606 = vmatpush1.msra.mxu0 0.0
    %1607 = vmatprep.mubr.f32.mxu0 0.0
    %1608 = vmatmul.mubr.f32.gmra.mrb[0].mxu0 %v1516
    %v1609 = vpop.f32.mrb[0].mxu0
    %v1610 = vadd.f32 %v1541, %v1609
    %v1611 = vpop.f32.mrb[0].mxu0
    %1612 = vmatprep.mubr.f32.mxu0 0.0
    %1613 = vmatmul.mubr.f32.gmra.mrb[0].mxu0 %v1517
    %v1614 = vpop.f32.mrb[0].mxu0
    %v1615 = vadd.f32 %v1541, %v1614
    %v1616 = vpop.f32.mrb[0].mxu0
    %1617 = vmatprep.mubr.f32.mxu0 0.0
    %1618 = vmatmul.mubr.f32.gmra.mrb[0].mxu0 %v1518
    %v1619 = vpop.f32.mrb[0].mxu0
    %v1620 = vadd.f32 %v1541, %v1619
    %v1621 = vpop.f32.mrb[0].mxu0
    %1622 = vmatprep.mubr.f32.mxu0 0.0
    %1623 = vmatmul.mubr.f32.gmra.mrb[0].mxu0 %v1519
    %v1624 = vpop.f32.mrb[0].mxu0
    %v1625 = vadd.f32 %v1541, %v1624
    %v1626 = vpop.f32.mrb[0].mxu0
    %1627 = vdwg.mxu0
    %v1628 = vmul.f32 %v1610, %v1610
    %v1629 = vmul.f32 %v1615, %v1615
    %v1630 = vmul.f32 %v1620, %v1620
    %v1631 = vmul.f32 %v1625, %v1625
    %1632 = vadd.xlane.f32.xlu0 %v1628
    %v1633 = vpop.xlane.xlu0 %1632
    %1634 = vadd.xlane.f32.xlu0 %v1629
    %v1635 = vpop.xlane.xlu0 %1634
    %1636 = vadd.xlane.f32.xlu0 %v1630
    %v1637 = vpop.xlane.xlu0 %1636
    %1638 = vadd.xlane.f32.xlu0 %v1631
    %v1639 = vpop.xlane.xlu0 %1638
    %v1640 = vadd.f32 %v1633, 1e-12
    %v1641 = vadd.f32 %v1635, 1e-12
    %v1642 = vadd.f32 %v1637, 1e-12
    %v1643 = vadd.f32 %v1639, 1e-12
    %v1644 = vrsqrt.pop %v1640
    %v1645 = vrsqrt.pop %v1641
    %v1646 = vrsqrt.pop %v1642
    %v1647 = vrsqrt.pop %v1643
    %v1648 = vmul.f32 %v1610, %v1644
    %v1649 = vmul.f32 %v1615, %v1645
    %v1650 = vmul.f32 %v1620, %v1646
    %v1651 = vmul.f32 %v1625, %v1647
    %v1652 = vlaneseq
    %v1653 = vand.u32 %v1652, 127
    %v1654 = vmul.f32 %v641, %v1311
    %v1655 = vmul.f32 %v642, %v1312
    %v1656 = vmul.f32 %v643, %v1313
    %v1657 = vmul.f32 %v644, %v1314
    %1658 = vadd.xlane.f32.xlu0 %v1654
    %v1659 = vpop.xlane.xlu0 %1658
    %1660 = vadd.xlane.f32.xlu0 %v1655
    %v1661 = vpop.xlane.xlu0 %1660
    %1662 = vadd.xlane.f32.xlu0 %v1656
    %v1663 = vpop.xlane.xlu0 %1662
    %1664 = vadd.xlane.f32.xlu0 %v1657
    %v1665 = vpop.xlane.xlu0 %1664
    %vm1666 = vcmp.eq.s32.totalorder %v1653, 0
    %v1667 = vsel %vm1666, %v1659, 0.0
    %v1668 = vsel %vm1666, %v1661, 0.0
    %v1669 = vsel %vm1666, %v1663, 0.0
    %v1670 = vsel %vm1666, %v1665, 0.0
    %v1671 = vmul.f32 %v641, %v1648
    %v1672 = vmul.f32 %v642, %v1649
    %v1673 = vmul.f32 %v643, %v1650
    %v1674 = vmul.f32 %v644, %v1651
    %1675 = vadd.xlane.f32.xlu0 %v1671
    %v1676 = vpop.xlane.xlu0 %1675
    %1677 = vadd.xlane.f32.xlu0 %v1672
    %v1678 = vpop.xlane.xlu0 %1677
    %1679 = vadd.xlane.f32.xlu0 %v1673
    %v1680 = vpop.xlane.xlu0 %1679
    %1681 = vadd.xlane.f32.xlu0 %v1674
    %v1682 = vpop.xlane.xlu0 %1681
    %vm1683 = vcmp.eq.s32.totalorder %v1653, 1
    %v1684 = vsel %vm1683, %v1676, %v1667
    %v1685 = vsel %vm1683, %v1678, %v1668
    %v1686 = vsel %vm1683, %v1680, %v1669
    %v1687 = vsel %vm1683, %v1682, %v1670
    %v1688 = vmul.f32 %v1684, 0.25
    %v1689 = vmul.f32 %v1685, 0.25
    %v1690 = vmul.f32 %v1686, 0.25
    %v1691 = vmul.f32 %v1687, 0.25
    %vm1692 = vcmask 15360
    %v1693 = vsel %vm1692, %v1688, -inf
    %1694 = vmax.xlane.f32.xlu0 %v1693
    %v1695 = vpop.xlane.xlu0 %1694
    %v1696 = vsel %vm1692, %v1689, -inf
    %1697 = vmax.xlane.f32.xlu0 %v1696
    %v1698 = vpop.xlane.xlu0 %1697
    %v1699 = vsel %vm1692, %v1690, -inf
    %1700 = vmax.xlane.f32.xlu0 %v1699
    %v1701 = vpop.xlane.xlu0 %1700
    %v1702 = vsel %vm1692, %v1691, -inf
    %1703 = vmax.xlane.f32.xlu0 %v1702
    %v1704 = vpop.xlane.xlu0 %1703
    %v1705 = vsub.f32 %v1688, %v1695
    %v1706 = vsub.f32 %v1689, %v1698
    %v1707 = vsub.f32 %v1690, %v1701
    %v1708 = vsub.f32 %v1691, %v1704
    %v1709 = vmul.f32 %v1705, 1.442695
    %v1710 = vpow.pop %v1709
    %v1711 = vmul.f32 %v1706, 1.442695
    %v1712 = vpow.pop %v1711
    %v1713 = vmul.f32 %v1707, 1.442695
    %v1714 = vpow.pop %v1713
    %v1715 = vmul.f32 %v1708, 1.442695
    %v1716 = vpow.pop %v1715
    %v1717 = vsel %vm1692, %v1710, 0.0
    %1718 = vadd.xlane.f32.xlu0 %v1717
    %v1719 = vpop.xlane.xlu0 %1718
    %v1720 = vsel %vm1692, %v1712, 0.0
    %1721 = vadd.xlane.f32.xlu0 %v1720
    %v1722 = vpop.xlane.xlu0 %1721
    %v1723 = vsel %vm1692, %v1714, 0.0
    %1724 = vadd.xlane.f32.xlu0 %v1723
    %v1725 = vpop.xlane.xlu0 %1724
    %v1726 = vsel %vm1692, %v1716, 0.0
    %1727 = vadd.xlane.f32.xlu0 %v1726
    %v1728 = vpop.xlane.xlu0 %1727
    %v1729 = vrcp.pop %v1719
    %v1730 = vrcp.pop %v1722
    %v1731 = vrcp.pop %v1725
    %v1732 = vrcp.pop %v1728
    %v1733 = vmul.f32 %v1710, %v1729
    %v1734 = vmul.f32 %v1712, %v1730
    %v1735 = vmul.f32 %v1714, %v1731
    %v1736 = vmul.f32 %v1716, %v1732
    %1737 = vst.msk [vmem:[%s20] sm:$0xff] %vm1692, %v1733
    %1738 = vst.msk [vmem:[%s20 + $0x8] sm:$0xff] %vm1692, %v1734
    %1739 = vst.msk [vmem:[%s20 + $0x10] sm:$0xff] %vm1692, %v1735
    %1740 = vst.msk [vmem:[%s20 + $0x18] sm:$0xff] %vm1692, %v1736
    %v1741 = vmul.f32 %v978, %v1311
    %v1742 = vmul.f32 %v979, %v1312
    %v1743 = vmul.f32 %v980, %v1313
    %v1744 = vmul.f32 %v981, %v1314
    %1745 = vadd.xlane.f32.xlu0 %v1741
    %v1746 = vpop.xlane.xlu0 %1745
    %1747 = vadd.xlane.f32.xlu0 %v1742
    %v1748 = vpop.xlane.xlu0 %1747
    %1749 = vadd.xlane.f32.xlu0 %v1743
    %v1750 = vpop.xlane.xlu0 %1749
    %1751 = vadd.xlane.f32.xlu0 %v1744
    %v1752 = vpop.xlane.xlu0 %1751
    %v1753 = vsel %vm1666, %v1746, 0.0
    %v1754 = vsel %vm1666, %v1748, 0.0
    %v1755 = vsel %vm1666, %v1750, 0.0
    %v1756 = vsel %vm1666, %v1752, 0.0
    %v1757 = vmul.f32 %v978, %v1648
    %v1758 = vmul.f32 %v979, %v1649
    %v1759 = vmul.f32 %v980, %v1650
    %v1760 = vmul.f32 %v981, %v1651
    %1761 = vadd.xlane.f32.xlu0 %v1757
    %v1762 = vpop.xlane.xlu0 %1761
    %1763 = vadd.xlane.f32.xlu0 %v1758
    %v1764 = vpop.xlane.xlu0 %1763
    %1765 = vadd.xlane.f32.xlu0 %v1759
    %v1766 = vpop.xlane.xlu0 %1765
    %1767 = vadd.xlane.f32.xlu0 %v1760
    %v1768 = vpop.xlane.xlu0 %1767
    %v1769 = vsel %vm1683, %v1762, %v1753
    %v1770 = vsel %vm1683, %v1764, %v1754
    %v1771 = vsel %vm1683, %v1766, %v1755
    %v1772 = vsel %vm1683, %v1768, %v1756
    %v1773 = vmul.f32 %v1769, 0.25
    %v1774 = vmul.f32 %v1770, 0.25
    %v1775 = vmul.f32 %v1771, 0.25
    %v1776 = vmul.f32 %v1772, 0.25
    %v1777 = vsel %vm1692, %v1773, -inf
    %1778 = vmax.xlane.f32.xlu0 %v1777
    %v1779 = vpop.xlane.xlu0 %1778
    %v1780 = vsel %vm1692, %v1774, -inf
    %1781 = vmax.xlane.f32.xlu0 %v1780
    %v1782 = vpop.xlane.xlu0 %1781
    %v1783 = vsel %vm1692, %v1775, -inf
    %1784 = vmax.xlane.f32.xlu0 %v1783
    %v1785 = vpop.xlane.xlu0 %1784
    %v1786 = vsel %vm1692, %v1776, -inf
    %1787 = vmax.xlane.f32.xlu0 %v1786
    %v1788 = vpop.xlane.xlu0 %1787
    %v1789 = vsub.f32 %v1773, %v1779
    %v1790 = vsub.f32 %v1774, %v1782
    %v1791 = vsub.f32 %v1775, %v1785
    %v1792 = vsub.f32 %v1776, %v1788
    %v1793 = vmul.f32 %v1789, 1.442695
    %v1794 = vpow.pop %v1793
    %v1795 = vmul.f32 %v1790, 1.442695
    %v1796 = vpow.pop %v1795
    %v1797 = vmul.f32 %v1791, 1.442695
    %v1798 = vpow.pop %v1797
    %v1799 = vmul.f32 %v1792, 1.442695
    %v1800 = vpow.pop %v1799
    %v1801 = vsel %vm1692, %v1794, 0.0
    %1802 = vadd.xlane.f32.xlu0 %v1801
    %v1803 = vpop.xlane.xlu0 %1802
    %v1804 = vsel %vm1692, %v1796, 0.0
    %1805 = vadd.xlane.f32.xlu0 %v1804
    %v1806 = vpop.xlane.xlu0 %1805
    %v1807 = vsel %vm1692, %v1798, 0.0
    %1808 = vadd.xlane.f32.xlu0 %v1807
    %v1809 = vpop.xlane.xlu0 %1808
    %v1810 = vsel %vm1692, %v1800, 0.0
    %1811 = vadd.xlane.f32.xlu0 %v1810
    %v1812 = vpop.xlane.xlu0 %1811
    %v1813 = vrcp.pop %v1803
    %v1814 = vrcp.pop %v1806
    %v1815 = vrcp.pop %v1809
    %v1816 = vrcp.pop %v1812
    %v1817 = vmul.f32 %v1794, %v1813
    %v1818 = vmul.f32 %v1796, %v1814
    %v1819 = vmul.f32 %v1798, %v1815
    %v1820 = vmul.f32 %v1800, %v1816
    %s1821 = scalar_lea.vmem %s20, 32
    %1822 = vst.msk [vmem:[%s1821] sm:$0xff] %vm1692, %v1817
    %1823 = vst.msk [vmem:[%s1821 + $0x8] sm:$0xff] %vm1692, %v1818
    %1824 = vst.msk [vmem:[%s1821 + $0x10] sm:$0xff] %vm1692, %v1819
    %1825 = vst.msk [vmem:[%s1821 + $0x18] sm:$0xff] %vm1692, %v1820
    // Predicated region
    $region126: #{tpu_custom_call.1} parent=1 // pred_check
      _
    $region127: #{tpu_custom_call.1} parent=1 // pred_check_branch
      %1827 = sbr.rel (0) target = $region129
    $region128: #{tpu_custom_call.1} parent=1 // pred_region
      _
    $region129: #{tpu_custom_call.1} parent=1 // pred_fallthru
      _
    // Predicated region
    $region130: #{tpu_custom_call.1} parent=1 // pred_check
      _
    $region131: #{tpu_custom_call.1} parent=1 // pred_check_branch
      %1829 = sbr.rel (0) target = $region133
    $region132: #{tpu_custom_call.1} parent=1 // pred_region
      _
    $region133: #{tpu_custom_call.1} parent=1 // pred_fallthru
      _
    %1830 = vsyncpa [#allocation3], 1
    %1831 = vsyncpa [#allocation5], 1
    %1832 = vsyncpa [#allocation8], 1
    %1833 = vsyncpa [#allocation11], 1
    %1834 = vsyncpa [#allocation14], 1
    %1835 = vsyncpa [#allocation17], 1

</llo_original>
